<compile_context>
chip_gen: v6e
topology: v6e:2x2x1
jax: 0.10.0
libtpu: 0.0.40
codegen_flags: <defaults>
</compile_context>

<pallas_src>
import functools

import jax
import jax.numpy as jnp
from jax.experimental import pallas as pl
from jax.experimental.pallas import tpu as pltpu


def _space_to_depth_kernel(x_ref, o_ref, *, block_size, w_out):
    """x_ref: (tile_r, bs, W) with W = w_out*bs; o_ref: (bs*bs, tile_r, w_out).

    Writes o_ref[hi*bs + wi, r, wo] = x_ref[r, hi, wo*bs + wi].
    """
    bs = block_size
    w_in = w_out * bs

    # One-hot selection masks, one per wi: sels[wi][wo, w] = (w == wo*bs + wi).
    col = jax.lax.broadcasted_iota(jnp.int32, (w_out, w_in), 1)   # w index
    row = jax.lax.broadcasted_iota(jnp.int32, (w_out, w_in), 0)   # wo index
    sels = [col == row * bs + wi for wi in range(bs)]

    zero = jnp.zeros((), dtype=o_ref.dtype)
    for hi in range(bs):
        xh = x_ref[:, hi, :]            # (tile_r, W): sublane-indexed sub-block load
        xb = xh[:, None, :]             # (tile_r, 1, W)
        for wi in range(bs):
            # Exact gather: the mask keeps exactly one W-lane per output column,
            # so the lane reduction has a single non-zero term (exact in any dtype).
            z = jnp.where(sels[wi][None, :, :], xb, zero)   # (tile_r, w_out, W)
            o_ref[hi * bs + wi] = jnp.sum(z, axis=-1)       # (tile_r, w_out)


def _pick_row_tile(total_rows, target_rows=512):
    """Largest row tile that divides total_rows, is <= target_rows, and is a
    multiple of 8 (sublane-aligned).  Falls back to the full row count (always a
    legal block: second-minor dim equal to the full array dim)."""
    cap = min(target_rows, total_rows)
    if total_rows >= 16:
        # Prefer >= 2 grid steps: enables pipelining and v7x 2-TC sharding, and
        # keeps the masked-reduce's per-step vreg footprint modest.
        cap = min(cap, total_rows // 2)
    best = None
    for d in range(8, cap + 1, 8):
        if total_rows % d == 0:
            best = d
    return best if best is not None else total_rows


@functools.partial(jax.jit, static_argnums=(1,))
def space_to_depth(x, block_size):
    """Pallas TPU SpaceToDepth: (B, C, H, W) -> (bs*bs, B, C, H//bs, W//bs)."""
    bs = int(block_size)
    B, C, H, W = x.shape
    assert H % bs == 0 and W % bs == 0, "H and W must be divisible by block_size"
    h_out, w_out = H // bs, W // bs

    rows = B * C * h_out
    # Free (row-major) reshape: row index enumerates (b, c, ho); no HBM copy.
    x_rows = x.reshape(rows, bs, W)

    tile_r = _pick_row_tile(rows)
    grid = (rows // tile_r,)

    kernel = functools.partial(_space_to_depth_kernel, block_size=bs, w_out=w_out)
    out = pl.pallas_call(
        kernel,
        out_shape=jax.ShapeDtypeStruct((bs * bs, rows, w_out), x.dtype),
        grid=grid,
        in_specs=[pl.BlockSpec((tile_r, bs, W), lambda i: (i, 0, 0))],
        out_specs=pl.BlockSpec((bs * bs, tile_r, w_out), lambda i: (0, i, 0)),
        compiler_params=pltpu.CompilerParams(
            dimension_semantics=("parallel",),
            vmem_limit_bytes=48 * 1024 * 1024,
        ),
    )(x_rows)

    # Free reshape back to the PyTorch output layout.
    return out.reshape(bs * bs, B, C, h_out, w_out)


if __name__ == "__main__":
    B, C, H, W = 2, 4, 16, 16
    block_size = 2
    x = jax.random.normal(jax.random.PRNGKey(0), (B, C, H, W), jnp.float32)

    out = space_to_depth(x, block_size)
    out = jax.block_until_ready(out)

    # Pure-JAX reference with the exact PyTorch SpaceToDepth semantics.
    bs = block_size
    ref = (
        x.reshape(B, C, H // bs, bs, W // bs, bs)
        .transpose(3, 5, 0, 1, 2, 4)
        .reshape(bs * bs, B, C, H // bs, W // bs)
    )

    assert out.shape == (bs * bs, B, C, H // bs, W // bs)
    assert out.dtype == x.dtype
    assert bool(jnp.all(jnp.isfinite(out)))
    assert bool(jnp.array_equal(out, ref)), "Pallas SpaceToDepth mismatch vs reference"
    print("KERNEL_OK")
</pallas_src>

<mosaic_0001>
module attributes {stable_mosaic.version = 11 : i64} {
  func.func @_space_to_depth_kernel(%arg0: i32, %arg1: memref<32x2x16xf32, #tpu.memory_space<vmem>>, %arg2: memref<4x32x8xf32, #tpu.memory_space<vmem>>) attributes {dimension_semantics = [#tpu.dimension_semantics<parallel>], iteration_bounds = array<i64: 2>, scalar_prefetch = 0 : i64, scratch_operands = 0 : i64, tpu.core_type = #tpu.core_type<tc>, window_params = [{transform_indices = @transform_0, window_bounds = array<i64: 32, 2, 16>}, {transform_indices = @transform_1, window_bounds = array<i64: 4, 32, 8>}]} {
    %0 = tpu.iota {dimensions = array<i32: 1>} : vector<8x16xi32>
    %1 = tpu.iota {dimensions = array<i32: 0>} : vector<8x16xi32>
    %c2_i32 = arith.constant 2 : i32
    %2 = vector.broadcast %c2_i32 : i32 to vector<8x16xi32>
    %3 = arith.muli %1, %2 : vector<8x16xi32>
    %c0_i32 = arith.constant 0 : i32
    %4 = vector.broadcast %c0_i32 : i32 to vector<8x16xi32>
    %5 = arith.addi %3, %4 : vector<8x16xi32>
    %6 = arith.cmpi eq, %0, %5 : vector<8x16xi32>
    %c2_i32_0 = arith.constant 2 : i32
    %7 = vector.broadcast %c2_i32_0 : i32 to vector<8x16xi32>
    %8 = arith.muli %1, %7 : vector<8x16xi32>
    %c1_i32 = arith.constant 1 : i32
    %9 = vector.broadcast %c1_i32 : i32 to vector<8x16xi32>
    %10 = arith.addi %8, %9 : vector<8x16xi32>
    %11 = arith.cmpi eq, %0, %10 : vector<8x16xi32>
    %c0 = arith.constant 0 : index
    %c0_1 = arith.constant 0 : index
    %c0_2 = arith.constant 0 : index
    %12 = vector.load %arg1[%c0, %c0_1, %c0_2] : memref<32x2x16xf32, #tpu.memory_space<vmem>>, vector<32x1x16xf32>
    %13 = vector.shape_cast %12 : vector<32x1x16xf32> to vector<32x16xf32>
    %14 = vector.shape_cast %13 : vector<32x16xf32> to vector<32x1x16xf32>
    %15 = vector.shape_cast %6 : vector<8x16xi1> to vector<1x8x16xi1>
    %cst = arith.constant 0.000000e+00 : f32
    %16 = vector.shape_cast %15 : vector<1x8x16xi1> to vector<1x8x16xi1>
    %17 = vector.broadcast %16 : vector<1x8x16xi1> to vector<32x8x16xi1>
    %18 = vector.shape_cast %14 : vector<32x1x16xf32> to vector<32x1x16xf32>
    %19 = vector.broadcast %18 : vector<32x1x16xf32> to vector<32x8x16xf32>
    %20 = vector.broadcast %cst : f32 to vector<32x8x16xf32>
    %21 = arith.select %17, %19, %20 : vector<32x8x16xi1>, vector<32x8x16xf32>
    %cst_3 = arith.constant dense<0.000000e+00> : vector<32x8xf32>
    %22 = vector.multi_reduction <add>, %21, %cst_3 [2] : vector<32x8x16xf32> to vector<32x8xf32>
    %c0_4 = arith.constant 0 : index
    %c0_5 = arith.constant 0 : index
    %c0_6 = arith.constant 0 : index
    %23 = vector.load %arg2[%c0_4, %c0_5, %c0_6] : memref<4x32x8xf32, #tpu.memory_space<vmem>>, vector<1x32x8xf32>
    %24 = vector.shape_cast %23 : vector<1x32x8xf32> to vector<32x8xf32>
    %25 = vector.shape_cast %22 : vector<32x8xf32> to vector<1x32x8xf32>
    tpu.vector_store %arg2[%c0_4, %c0_5, %c0_6], %25 {strides = array<i32>} : memref<4x32x8xf32, #tpu.memory_space<vmem>>, vector<1x32x8xf32>,
    %26 = vector.shape_cast %11 : vector<8x16xi1> to vector<1x8x16xi1>
    %cst_7 = arith.constant 0.000000e+00 : f32
    %27 = vector.shape_cast %26 : vector<1x8x16xi1> to vector<1x8x16xi1>
    %28 = vector.broadcast %27 : vector<1x8x16xi1> to vector<32x8x16xi1>
    %29 = vector.shape_cast %14 : vector<32x1x16xf32> to vector<32x1x16xf32>
    %30 = vector.broadcast %29 : vector<32x1x16xf32> to vector<32x8x16xf32>
    %31 = vector.broadcast %cst_7 : f32 to vector<32x8x16xf32>
    %32 = arith.select %28, %30, %31 : vector<32x8x16xi1>, vector<32x8x16xf32>
    %cst_8 = arith.constant dense<0.000000e+00> : vector<32x8xf32>
    %33 = vector.multi_reduction <add>, %32, %cst_8 [2] : vector<32x8x16xf32> to vector<32x8xf32>
    %c1 = arith.constant 1 : index
    %c0_9 = arith.constant 0 : index
    %c0_10 = arith.constant 0 : index
    %34 = vector.load %arg2[%c1, %c0_9, %c0_10] : memref<4x32x8xf32, #tpu.memory_space<vmem>>, vector<1x32x8xf32>
    %35 = vector.shape_cast %34 : vector<1x32x8xf32> to vector<32x8xf32>
    %36 = vector.shape_cast %33 : vector<32x8xf32> to vector<1x32x8xf32>
    tpu.vector_store %arg2[%c1, %c0_9, %c0_10], %36 {strides = array<i32>} : memref<4x32x8xf32, #tpu.memory_space<vmem>>, vector<1x32x8xf32>,
    %c0_11 = arith.constant 0 : index
    %c1_12 = arith.constant 1 : index
    %c0_13 = arith.constant 0 : index
    %37 = vector.load %arg1[%c0_11, %c1_12, %c0_13] : memref<32x2x16xf32, #tpu.memory_space<vmem>>, vector<32x1x16xf32>
    %38 = vector.shape_cast %37 : vector<32x1x16xf32> to vector<32x16xf32>
    %39 = vector.shape_cast %38 : vector<32x16xf32> to vector<32x1x16xf32>
    %40 = vector.shape_cast %6 : vector<8x16xi1> to vector<1x8x16xi1>
    %cst_14 = arith.constant 0.000000e+00 : f32
    %41 = vector.shape_cast %40 : vector<1x8x16xi1> to vector<1x8x16xi1>
    %42 = vector.broadcast %41 : vector<1x8x16xi1> to vector<32x8x16xi1>
    %43 = vector.shape_cast %39 : vector<32x1x16xf32> to vector<32x1x16xf32>
    %44 = vector.broadcast %43 : vector<32x1x16xf32> to vector<32x8x16xf32>
    %45 = vector.broadcast %cst_14 : f32 to vector<32x8x16xf32>
    %46 = arith.select %42, %44, %45 : vector<32x8x16xi1>, vector<32x8x16xf32>
    %cst_15 = arith.constant dense<0.000000e+00> : vector<32x8xf32>
    %47 = vector.multi_reduction <add>, %46, %cst_15 [2] : vector<32x8x16xf32> to vector<32x8xf32>
    %c2 = arith.constant 2 : index
    %c0_16 = arith.constant 0 : index
    %c0_17 = arith.constant 0 : index
    %48 = vector.load %arg2[%c2, %c0_16, %c0_17] : memref<4x32x8xf32, #tpu.memory_space<vmem>>, vector<1x32x8xf32>
    %49 = vector.shape_cast %48 : vector<1x32x8xf32> to vector<32x8xf32>
    %50 = vector.shape_cast %47 : vector<32x8xf32> to vector<1x32x8xf32>
    tpu.vector_store %arg2[%c2, %c0_16, %c0_17], %50 {strides = array<i32>} : memref<4x32x8xf32, #tpu.memory_space<vmem>>, vector<1x32x8xf32>,
    %51 = vector.shape_cast %11 : vector<8x16xi1> to vector<1x8x16xi1>
    %cst_18 = arith.constant 0.000000e+00 : f32
    %52 = vector.shape_cast %51 : vector<1x8x16xi1> to vector<1x8x16xi1>
    %53 = vector.broadcast %52 : vector<1x8x16xi1> to vector<32x8x16xi1>
    %54 = vector.shape_cast %39 : vector<32x1x16xf32> to vector<32x1x16xf32>
    %55 = vector.broadcast %54 : vector<32x1x16xf32> to vector<32x8x16xf32>
    %56 = vector.broadcast %cst_18 : f32 to vector<32x8x16xf32>
    %57 = arith.select %53, %55, %56 : vector<32x8x16xi1>, vector<32x8x16xf32>
    %cst_19 = arith.constant dense<0.000000e+00> : vector<32x8xf32>
    %58 = vector.multi_reduction <add>, %57, %cst_19 [2] : vector<32x8x16xf32> to vector<32x8xf32>
    %c3 = arith.constant 3 : index
    %c0_20 = arith.constant 0 : index
    %c0_21 = arith.constant 0 : index
    %59 = vector.load %arg2[%c3, %c0_20, %c0_21] : memref<4x32x8xf32, #tpu.memory_space<vmem>>, vector<1x32x8xf32>
    %60 = vector.shape_cast %59 : vector<1x32x8xf32> to vector<32x8xf32>
    %61 = vector.shape_cast %58 : vector<32x8xf32> to vector<1x32x8xf32>
    tpu.vector_store %arg2[%c3, %c0_20, %c0_21], %61 {strides = array<i32>} : memref<4x32x8xf32, #tpu.memory_space<vmem>>, vector<1x32x8xf32>,
    return
  }
  func.func @transform_0(%arg0: i32) -> (i32, i32, i32) {
    %c0_i32 = arith.constant 0 : i32
    %c0_i32_0 = arith.constant 0 : i32
    %c0_i32_1 = arith.constant 0 : i32
    return %arg0, %c0_i32, %c0_i32_0 : i32, i32, i32
  }
  func.func @transform_1(%arg0: i32) -> (i32, i32, i32) {
    %c0_i32 = arith.constant 0 : i32
    %c0_i32_0 = arith.constant 0 : i32
    %c0_i32_1 = arith.constant 0 : i32
    return %c0_i32, %arg0, %c0_i32_0 : i32, i32, i32
  }
}

</mosaic_0001>

<llo_original>
// kernel: space_to_depth.1
$region0: #{space_to_depth.1}
  #allocation0 [shape = 'u32[]', space=smem, size = 0x4, offset = 0x4, fixed_abs, tag = 'smem constant byte address 0x4 - core index']
  #allocation1 [shape = 'u32[144,128]{1,0:T(1,128)}', space=vmem, size = 0x12000, scoped, tag = 'internal scratch']
  #allocation6 [shape = 's32[]', space=sflag, size = 0x4, offset = 0, fixed_abs, tag = 'sflag constant byte address 0x0 - dummy sync flag']
  %s0 = inlined_call_operand.hbm [shape: f32[64,2,16], index: 0, kind: input, shape index: {}]
  %s1 = inlined_call_operand.hbm [shape: f32[4,64,8], index: 1, kind: output, shape index: {}]
  %s2 = sld [smem:[#allocation0]]
  $region41: #{space_to_depth.1} parent=0
    _
  %s4 = ssub.s32 1, %s2
  %s5 = scalar_select 0, %s4, %s2
  $region1: #{space_to_depth.1} parent=0
    #allocation2 [shape = 'u8[65536]{0}', space=vmem, size = 0x10000, scoped, tag = 'input window, operand 0']
    #allocation3 [shape = 's32[2]{0}', space=sflag, size = 0x8, scoped, tag = 'scoped memory for space_to_depth.1']
    #allocation4 [shape = 's32[2]{0}', space=sflag, size = 0x8, scoped, tag = 'scoped memory for space_to_depth.1']
    #allocation5 [shape = 'u8[131072]{0}', space=vmem, size = 0x20000, scoped, tag = 'output window, operand 0']
    %6 = vsyncpa [#allocation3], 0
    %s7 = scalar_lea.sflag [#allocation3], 1
    %8 = vsyncpa %s7, 0
    %9 = vsyncpa [#allocation4], 0
    %s10 = scalar_lea.sflag [#allocation4], 1
    %11 = vsyncpa %s10, 0
    loop: start=0, step=1, limit=4
    $region2: #{space_to_depth.1} parent=1 // loop_pre_header
      _
    $region3: #{space_to_depth.1} parent=1 // loop_header
      %s13 = sphi 0, %s17
      %p14 = scmp.ge.s32.totalorder %s13, 4
      %s23 = sphi 0, %s25
      %s26 = sphi 0, %s23
      %s27 = sphi 0, %s26
      %s43 = sphi 0, %s27
      %s49 = sphi 0, %s51
      %s52 = sphi 0, %s49
      %s53 = sphi 0, %s52
      %s69 = sphi 0, %s53
    $region4: #{space_to_depth.1} parent=1 // loop_header_branch
      %16 = sbr.rel (%p14) target = $region8
    $region5: #{space_to_depth.1} parent=1 // loop_body
      %s18 = ssub.s32 %s13, 1
      %s19 = ssub.s32 %s13, 2
      %s20 = sadd.s32 %s13, 1
      %s21 = ssub.s32 %s13, %s20
      %p22 = scmp.eq.s32.totalorder %s21, 0
      %s24 = sadd.s32 %s23, 1
      %s25 = scalar_select %p22, %s23, %s24
      %p28 = pneg %p22
      %p29 = scmp.eq.s32.totalorder %s13, 1
      %p30 = por %p28, %p29
      %p31 = scmp.ne.s32.totalorder %s23, %s26
      %p32 = scmp.eq.s32.totalorder %s13, 0
      %p33 = por %p31, %p32
      %p34 = scmp.ne.s32.totalorder %s23, %s26
      %p35 = scmp.eq.s32.totalorder %s18, 1
      %p36 = por %p34, %p35
      %p37 = scmp.ne.s32.totalorder %s26, %s27
      %p38 = scmp.eq.s32.totalorder %s18, 0
      %p39 = por %p37, %p38
      %p40 = scmp.ne.s32.totalorder %s26, %s27
      %p41 = scmp.eq.s32.totalorder %s19, 1
      %p42 = por %p40, %p41
      %p44 = scmp.ne.s32.totalorder %s27, %s43
      %p45 = scmp.eq.s32.totalorder %s19, 0
      %p46 = por %p44, %p45
      %s47 = ssub.s32 %s13, %s20
      %p48 = scmp.eq.s32.totalorder %s47, 0
      %s50 = sadd.s32 %s49, 1
      %s51 = scalar_select %p48, %s49, %s50
      %p54 = pneg %p48
      %p55 = scmp.eq.s32.totalorder %s13, 1
      %p56 = por %p54, %p55
      %p57 = scmp.ne.s32.totalorder %s49, %s52
      %p58 = scmp.eq.s32.totalorder %s13, 0
      %p59 = por %p57, %p58
      %p60 = scmp.ne.s32.totalorder %s49, %s52
      %p61 = scmp.eq.s32.totalorder %s18, 1
      %p62 = por %p60, %p61
      %p63 = scmp.ne.s32.totalorder %s52, %s53
      %p64 = scmp.eq.s32.totalorder %s18, 0
      %p65 = por %p63, %p64
      %p66 = scmp.ne.s32.totalorder %s52, %s53
      %p67 = scmp.eq.s32.totalorder %s19, 1
      %p68 = por %p66, %p67
      %p70 = scmp.ne.s32.totalorder %s53, %s69
      %p71 = scmp.eq.s32.totalorder %s19, 0
      %p72 = por %p70, %p71
      %p73 = scmp.le.s32.totalorder 1, %s13
      %p74 = scmp.lt.s32.totalorder %s13, 3
      %p75 = pnand %p73, %p74
      %p76 = pneg %p75
      // Predicated region
      $region9: #{space_to_depth.1} parent=5 // pred_check
        _
      $region10: #{space_to_depth.1} parent=5 // pred_check_branch
        %78 = sbr.rel (%p75) target = $region12
      $region11: #{space_to_depth.1} parent=5 // pred_region
        %s79 = ssub.s32 %s13, 1
      $region12: #{space_to_depth.1} parent=5 // pred_fallthru
        _
      %p80 = scmp.lt.s32.totalorder %s13, 2
      // Predicated region
      $region13: #{space_to_depth.1} parent=5 // pred_check
        %p81 = pneg %p80
      $region14: #{space_to_depth.1} parent=5 // pred_check_branch
        %83 = sbr.rel (%p81) target = $region16
      $region15: #{space_to_depth.1} parent=5 // pred_region
        // Predicated region
        $region17: #{space_to_depth.1} parent=15 // pred_check
          %p84 = pneg %p33
        $region18: #{space_to_depth.1} parent=15 // pred_check_branch
          %86 = sbr.rel (%p84) target = $region20
        $region19: #{space_to_depth.1} parent=15 // pred_region
          %s87 = sand.u32 %s23, 1
          %s88 = scalar_lea.sflag [#allocation3], %s87
          %s89 = sand.u32 %s23, 1
          %s90 = smul.addr %s89, 64
          %s91 = scalar_lea.vmem [#allocation2], %s90
          %s92 = smul.u32 32, %s13
          %s94 = ssub.s32 1024, 1024
          %95 = vsyncadd %s88, %s94
          %s96 = smul.addr %s92, 32
          %s97 = scalar_lea.hbm %s0, %s96
          %s98 = sshll.u32 %s91, 4
          %s99 = int_to_ptr.vmem [resolvable:$true] %s98
          %104 = dma.hbm_to_vmem [thread:$0]  %s97, 1024, %s99, %s88, 32, 32, 2
        $region20: #{space_to_depth.1} parent=15 // pred_fallthru
          _
      $region16: #{space_to_depth.1} parent=5 // pred_fallthru
        _
      %p105 = scmp.le.s32.totalorder 1, %s13
      %p106 = scmp.lt.s32.totalorder %s13, 3
      %p107 = pnand %p105, %p106
      %p108 = pneg %p107
      // Predicated region
      $region21: #{space_to_depth.1} parent=5 // pred_check
        _
      $region22: #{space_to_depth.1} parent=5 // pred_check_branch
        %110 = sbr.rel (%p107) target = $region24
      $region23: #{space_to_depth.1} parent=5 // pred_region
        %s111 = ssub.s32 %s13, 1
        %s112 = sand.u32 %s26, 1
        %s113 = scalar_lea.sflag [#allocation3], %s112
        %s114 = sand.u32 %s26, 1
        %s115 = smul.addr %s114, 64
        %s116 = scalar_lea.vmem [#allocation2], %s115
        // Predicated region
        $region25: #{space_to_depth.1} parent=23 // pred_check
          %p117 = pneg %p39
        $region26: #{space_to_depth.1} parent=23 // pred_check_branch
          %119 = sbr.rel (%p117) target = $region28
        $region27: #{space_to_depth.1} parent=23 // pred_region
          %120 = dma.done %s113, 1024
        $region28: #{space_to_depth.1} parent=23 // pred_fallthru
          _
        %s121 = sand.u32 %s26, 1
        %s122 = scalar_lea.sflag [#allocation3], %s121
        %s123 = sand.u32 %s26, 1
        %s124 = smul.addr %s123, 64
        %s125 = scalar_lea.vmem [#allocation2], %s124
        %p126 = pneg %p39
        %p127 = pneg %p36
        %p128 = pneg %p65
        %p129 = pneg %p62
        %s130 = sand.u32 %s52, 1
        %s131 = scalar_lea.sflag [#allocation4], %s130
        %s132 = sand.u32 %s52, 1
        %s133 = smul.addr %s132, 128
        %s134 = scalar_lea.vmem [#allocation5], %s133
        %s135 = smul.u32 32, %s18
        %s136 = smul.u32 4, %s18
        %v137 = vlaneseq
        %v138 = vand.u32 %v137, 127
        %v139 = vlaneseq
        %v140 = vshrl.u32 %v139, 7
        %v141 = vmul.u32 %v140, 2
        %vm142 = vcmp.eq.s32.totalorder %v138, %v141
        %v143 = vadd.s32 %v141, 1
        %vm144 = vcmp.eq.s32.totalorder %v138, %v143
        %v145 = vld [vmem:[%s116] sm:$0x1]
        %v146 = vld [vmem:[%s116 + $0x2] sm:$0x1]
        %v147 = vld [vmem:[%s116 + $0x4] sm:$0x1]
        %v148 = vld [vmem:[%s116 + $0x6] sm:$0x1]
        %v149 = vld [vmem:[%s116 + $0x8] sm:$0x1]
        %v150 = vld [vmem:[%s116 + $0xa] sm:$0x1]
        %v151 = vld [vmem:[%s116 + $0xc] sm:$0x1]
        %v152 = vld [vmem:[%s116 + $0xe] sm:$0x1]
        %v153 = vld [vmem:[%s116 + $0x10] sm:$0x1]
        %v154 = vld [vmem:[%s116 + $0x12] sm:$0x1]
        %v155 = vld [vmem:[%s116 + $0x14] sm:$0x1]
        %v156 = vld [vmem:[%s116 + $0x16] sm:$0x1]
        %v157 = vld [vmem:[%s116 + $0x18] sm:$0x1]
        %v158 = vld [vmem:[%s116 + $0x1a] sm:$0x1]
        %v159 = vld [vmem:[%s116 + $0x1c] sm:$0x1]
        %v160 = vld [vmem:[%s116 + $0x1e] sm:$0x1]
        %v161 = vld [vmem:[%s116 + $0x20] sm:$0x1]
        %v162 = vld [vmem:[%s116 + $0x22] sm:$0x1]
        %v163 = vld [vmem:[%s116 + $0x24] sm:$0x1]
        %v164 = vld [vmem:[%s116 + $0x26] sm:$0x1]
        %v165 = vld [vmem:[%s116 + $0x28] sm:$0x1]
        %v166 = vld [vmem:[%s116 + $0x2a] sm:$0x1]
        %v167 = vld [vmem:[%s116 + $0x2c] sm:$0x1]
        %v168 = vld [vmem:[%s116 + $0x2e] sm:$0x1]
        %v169 = vld [vmem:[%s116 + $0x30] sm:$0x1]
        %v170 = vld [vmem:[%s116 + $0x32] sm:$0x1]
        %v171 = vld [vmem:[%s116 + $0x34] sm:$0x1]
        %v172 = vld [vmem:[%s116 + $0x36] sm:$0x1]
        %v173 = vld [vmem:[%s116 + $0x38] sm:$0x1]
        %v174 = vld [vmem:[%s116 + $0x3a] sm:$0x1]
        %v175 = vld [vmem:[%s116 + $0x3c] sm:$0x1]
        %v176 = vld [vmem:[%s116 + $0x3e] sm:$0x1]
        %v177 = vsel %vm142, 1, 0
        %vm178 = vcmp.eq.s32.totalorder %v177, 1
        %v179 = vlaneseq
        %v180 = vshrl.u32 %v179, 7
        %v181 = vsub.s32 0, %v180
        %v182 = vrot.slane %v145, %v181
        %v183 = vlaneseq
        %v184 = vshrl.u32 %v183, 7
        %v185 = vsub.s32 0, %v184
        %v186 = vrot.slane %v146, %v185
        %v187 = vlaneseq
        %v188 = vshrl.u32 %v187, 7
        %v189 = vsub.s32 0, %v188
        %v190 = vrot.slane %v147, %v189
        %v191 = vlaneseq
        %v192 = vshrl.u32 %v191, 7
        %v193 = vsub.s32 0, %v192
        %v194 = vrot.slane %v148, %v193
        %v195 = vlaneseq
        %v196 = vshrl.u32 %v195, 7
        %v197 = vsub.s32 0, %v196
        %v198 = vrot.slane %v149, %v197
        %v199 = vlaneseq
        %v200 = vshrl.u32 %v199, 7
        %v201 = vsub.s32 0, %v200
        %v202 = vrot.slane %v150, %v201
        %v203 = vlaneseq
        %v204 = vshrl.u32 %v203, 7
        %v205 = vsub.s32 0, %v204
        %v206 = vrot.slane %v151, %v205
        %v207 = vlaneseq
        %v208 = vshrl.u32 %v207, 7
        %v209 = vsub.s32 0, %v208
        %v210 = vrot.slane %v152, %v209
        %v211 = vlaneseq
        %v212 = vshrl.u32 %v211, 7
        %v213 = vsub.s32 0, %v212
        %v214 = vrot.slane %v153, %v213
        %v215 = vlaneseq
        %v216 = vshrl.u32 %v215, 7
        %v217 = vsub.s32 0, %v216
        %v218 = vrot.slane %v154, %v217
        %v219 = vlaneseq
        %v220 = vshrl.u32 %v219, 7
        %v221 = vsub.s32 0, %v220
        %v222 = vrot.slane %v155, %v221
        %v223 = vlaneseq
        %v224 = vshrl.u32 %v223, 7
        %v225 = vsub.s32 0, %v224
        %v226 = vrot.slane %v156, %v225
        %v227 = vlaneseq
        %v228 = vshrl.u32 %v227, 7
        %v229 = vsub.s32 0, %v228
        %v230 = vrot.slane %v157, %v229
        %v231 = vlaneseq
        %v232 = vshrl.u32 %v231, 7
        %v233 = vsub.s32 0, %v232
        %v234 = vrot.slane %v158, %v233
        %v235 = vlaneseq
        %v236 = vshrl.u32 %v235, 7
        %v237 = vsub.s32 0, %v236
        %v238 = vrot.slane %v159, %v237
        %v239 = vlaneseq
        %v240 = vshrl.u32 %v239, 7
        %v241 = vsub.s32 0, %v240
        %v242 = vrot.slane %v160, %v241
        %v243 = vlaneseq
        %v244 = vshrl.u32 %v243, 7
        %v245 = vsub.s32 0, %v244
        %v246 = vrot.slane %v161, %v245
        %v247 = vlaneseq
        %v248 = vshrl.u32 %v247, 7
        %v249 = vsub.s32 0, %v248
        %v250 = vrot.slane %v162, %v249
        %v251 = vlaneseq
        %v252 = vshrl.u32 %v251, 7
        %v253 = vsub.s32 0, %v252
        %v254 = vrot.slane %v163, %v253
        %v255 = vlaneseq
        %v256 = vshrl.u32 %v255, 7
        %v257 = vsub.s32 0, %v256
        %v258 = vrot.slane %v164, %v257
        %v259 = vlaneseq
        %v260 = vshrl.u32 %v259, 7
        %v261 = vsub.s32 0, %v260
        %v262 = vrot.slane %v165, %v261
        %v263 = vlaneseq
        %v264 = vshrl.u32 %v263, 7
        %v265 = vsub.s32 0, %v264
        %v266 = vrot.slane %v166, %v265
        %v267 = vlaneseq
        %v268 = vshrl.u32 %v267, 7
        %v269 = vsub.s32 0, %v268
        %v270 = vrot.slane %v167, %v269
        %v271 = vlaneseq
        %v272 = vshrl.u32 %v271, 7
        %v273 = vsub.s32 0, %v272
        %v274 = vrot.slane %v168, %v273
        %v275 = vlaneseq
        %v276 = vshrl.u32 %v275, 7
        %v277 = vsub.s32 0, %v276
        %v278 = vrot.slane %v169, %v277
        %v279 = vlaneseq
        %v280 = vshrl.u32 %v279, 7
        %v281 = vsub.s32 0, %v280
        %v282 = vrot.slane %v170, %v281
        %v283 = vlaneseq
        %v284 = vshrl.u32 %v283, 7
        %v285 = vsub.s32 0, %v284
        %v286 = vrot.slane %v171, %v285
        %v287 = vlaneseq
        %v288 = vshrl.u32 %v287, 7
        %v289 = vsub.s32 0, %v288
        %v290 = vrot.slane %v172, %v289
        %v291 = vlaneseq
        %v292 = vshrl.u32 %v291, 7
        %v293 = vsub.s32 0, %v292
        %v294 = vrot.slane %v173, %v293
        %v295 = vlaneseq
        %v296 = vshrl.u32 %v295, 7
        %v297 = vsub.s32 0, %v296
        %v298 = vrot.slane %v174, %v297
        %v299 = vlaneseq
        %v300 = vshrl.u32 %v299, 7
        %v301 = vsub.s32 0, %v300
        %v302 = vrot.slane %v175, %v301
        %v303 = vlaneseq
        %v304 = vshrl.u32 %v303, 7
        %v305 = vsub.s32 0, %v304
        %v306 = vrot.slane %v176, %v305
        %v307 = vsel %vm178, %v182, 0.0
        %v308 = vsel %vm178, %v186, 0.0
        %v309 = vsel %vm178, %v190, 0.0
        %v310 = vsel %vm178, %v194, 0.0
        %v311 = vsel %vm178, %v198, 0.0
        %v312 = vsel %vm178, %v202, 0.0
        %v313 = vsel %vm178, %v206, 0.0
        %v314 = vsel %vm178, %v210, 0.0
        %v315 = vsel %vm178, %v214, 0.0
        %v316 = vsel %vm178, %v218, 0.0
        %v317 = vsel %vm178, %v222, 0.0
        %v318 = vsel %vm178, %v226, 0.0
        %v319 = vsel %vm178, %v230, 0.0
        %v320 = vsel %vm178, %v234, 0.0
        %v321 = vsel %vm178, %v238, 0.0
        %v322 = vsel %vm178, %v242, 0.0
        %v323 = vsel %vm178, %v246, 0.0
        %v324 = vsel %vm178, %v250, 0.0
        %v325 = vsel %vm178, %v254, 0.0
        %v326 = vsel %vm178, %v258, 0.0
        %v327 = vsel %vm178, %v262, 0.0
        %v328 = vsel %vm178, %v266, 0.0
        %v329 = vsel %vm178, %v270, 0.0
        %v330 = vsel %vm178, %v274, 0.0
        %v331 = vsel %vm178, %v278, 0.0
        %v332 = vsel %vm178, %v282, 0.0
        %v333 = vsel %vm178, %v286, 0.0
        %v334 = vsel %vm178, %v290, 0.0
        %v335 = vsel %vm178, %v294, 0.0
        %v336 = vsel %vm178, %v298, 0.0
        %v337 = vsel %vm178, %v302, 0.0
        %v338 = vsel %vm178, %v306, 0.0
        %vm339 = vcmask 130048
        %v340 = vsel %vm339, %v307, 0.0
        %341 = vadd.xlane.f32.xlu0 %v340
        %v342 = vpop.xlane.xlu0 %341
        %v343 = vsel %vm339, %v308, 0.0
        %344 = vadd.xlane.f32.xlu0 %v343
        %v345 = vpop.xlane.xlu0 %344
        %v346 = vsel %vm339, %v309, 0.0
        %347 = vadd.xlane.f32.xlu0 %v346
        %v348 = vpop.xlane.xlu0 %347
        %v349 = vsel %vm339, %v310, 0.0
        %350 = vadd.xlane.f32.xlu0 %v349
        %v351 = vpop.xlane.xlu0 %350
        %v352 = vsel %vm339, %v311, 0.0
        %353 = vadd.xlane.f32.xlu0 %v352
        %v354 = vpop.xlane.xlu0 %353
        %v355 = vsel %vm339, %v312, 0.0
        %356 = vadd.xlane.f32.xlu0 %v355
        %v357 = vpop.xlane.xlu0 %356
        %v358 = vsel %vm339, %v313, 0.0
        %359 = vadd.xlane.f32.xlu0 %v358
        %v360 = vpop.xlane.xlu0 %359
        %v361 = vsel %vm339, %v314, 0.0
        %362 = vadd.xlane.f32.xlu0 %v361
        %v363 = vpop.xlane.xlu0 %362
        %v364 = vsel %vm339, %v315, 0.0
        %365 = vadd.xlane.f32.xlu0 %v364
        %v366 = vpop.xlane.xlu0 %365
        %v367 = vsel %vm339, %v316, 0.0
        %368 = vadd.xlane.f32.xlu0 %v367
        %v369 = vpop.xlane.xlu0 %368
        %v370 = vsel %vm339, %v317, 0.0
        %371 = vadd.xlane.f32.xlu0 %v370
        %v372 = vpop.xlane.xlu0 %371
        %v373 = vsel %vm339, %v318, 0.0
        %374 = vadd.xlane.f32.xlu0 %v373
        %v375 = vpop.xlane.xlu0 %374
        %v376 = vsel %vm339, %v319, 0.0
        %377 = vadd.xlane.f32.xlu0 %v376
        %v378 = vpop.xlane.xlu0 %377
        %v379 = vsel %vm339, %v320, 0.0
        %380 = vadd.xlane.f32.xlu0 %v379
        %v381 = vpop.xlane.xlu0 %380
        %v382 = vsel %vm339, %v321, 0.0
        %383 = vadd.xlane.f32.xlu0 %v382
        %v384 = vpop.xlane.xlu0 %383
        %v385 = vsel %vm339, %v322, 0.0
        %386 = vadd.xlane.f32.xlu0 %v385
        %v387 = vpop.xlane.xlu0 %386
        %v388 = vsel %vm339, %v323, 0.0
        %389 = vadd.xlane.f32.xlu0 %v388
        %v390 = vpop.xlane.xlu0 %389
        %v391 = vsel %vm339, %v324, 0.0
        %392 = vadd.xlane.f32.xlu0 %v391
        %v393 = vpop.xlane.xlu0 %392
        %v394 = vsel %vm339, %v325, 0.0
        %395 = vadd.xlane.f32.xlu0 %v394
        %v396 = vpop.xlane.xlu0 %395
        %v397 = vsel %vm339, %v326, 0.0
        %398 = vadd.xlane.f32.xlu0 %v397
        %v399 = vpop.xlane.xlu0 %398
        %v400 = vsel %vm339, %v327, 0.0
        %401 = vadd.xlane.f32.xlu0 %v400
        %v402 = vpop.xlane.xlu0 %401
        %v403 = vsel %vm339, %v328, 0.0
        %404 = vadd.xlane.f32.xlu0 %v403
        %v405 = vpop.xlane.xlu0 %404
        %v406 = vsel %vm339, %v329, 0.0
        %407 = vadd.xlane.f32.xlu0 %v406
        %v408 = vpop.xlane.xlu0 %407
        %v409 = vsel %vm339, %v330, 0.0
        %410 = vadd.xlane.f32.xlu0 %v409
        %v411 = vpop.xlane.xlu0 %410
        %v412 = vsel %vm339, %v331, 0.0
        %413 = vadd.xlane.f32.xlu0 %v412
        %v414 = vpop.xlane.xlu0 %413
        %v415 = vsel %vm339, %v332, 0.0
        %416 = vadd.xlane.f32.xlu0 %v415
        %v417 = vpop.xlane.xlu0 %416
        %v418 = vsel %vm339, %v333, 0.0
        %419 = vadd.xlane.f32.xlu0 %v418
        %v420 = vpop.xlane.xlu0 %419
        %v421 = vsel %vm339, %v334, 0.0
        %422 = vadd.xlane.f32.xlu0 %v421
        %v423 = vpop.xlane.xlu0 %422
        %v424 = vsel %vm339, %v335, 0.0
        %425 = vadd.xlane.f32.xlu0 %v424
        %v426 = vpop.xlane.xlu0 %425
        %v427 = vsel %vm339, %v336, 0.0
        %428 = vadd.xlane.f32.xlu0 %v427
        %v429 = vpop.xlane.xlu0 %428
        %v430 = vsel %vm339, %v337, 0.0
        %431 = vadd.xlane.f32.xlu0 %v430
        %v432 = vpop.xlane.xlu0 %431
        %v433 = vsel %vm339, %v338, 0.0
        %434 = vadd.xlane.f32.xlu0 %v433
        %v435 = vpop.xlane.xlu0 %434
        %v468 = vlaneseq
        %v469 = vshrl.u32 %v468, 7
        %v470 = vsub.s32 %v138, %v469
        %v471 = vrot.slane %v342, %v470
        %v472 = vlaneseq
        %v473 = vshrl.u32 %v472, 7
        %v474 = vsub.s32 %v138, %v473
        %v475 = vrot.slane %v345, %v474
        %v476 = vlaneseq
        %v477 = vshrl.u32 %v476, 7
        %v478 = vsub.s32 %v138, %v477
        %v479 = vrot.slane %v348, %v478
        %v480 = vlaneseq
        %v481 = vshrl.u32 %v480, 7
        %v482 = vsub.s32 %v138, %v481
        %v483 = vrot.slane %v351, %v482
        %v484 = vlaneseq
        %v485 = vshrl.u32 %v484, 7
        %v486 = vsub.s32 %v138, %v485
        %v487 = vrot.slane %v354, %v486
        %v488 = vlaneseq
        %v489 = vshrl.u32 %v488, 7
        %v490 = vsub.s32 %v138, %v489
        %v491 = vrot.slane %v357, %v490
        %v492 = vlaneseq
        %v493 = vshrl.u32 %v492, 7
        %v494 = vsub.s32 %v138, %v493
        %v495 = vrot.slane %v360, %v494
        %v496 = vlaneseq
        %v497 = vshrl.u32 %v496, 7
        %v498 = vsub.s32 %v138, %v497
        %v499 = vrot.slane %v363, %v498
        %v500 = vlaneseq
        %v501 = vshrl.u32 %v500, 7
        %v502 = vsub.s32 %v138, %v501
        %v503 = vrot.slane %v366, %v502
        %v504 = vlaneseq
        %v505 = vshrl.u32 %v504, 7
        %v506 = vsub.s32 %v138, %v505
        %v507 = vrot.slane %v369, %v506
        %v508 = vlaneseq
        %v509 = vshrl.u32 %v508, 7
        %v510 = vsub.s32 %v138, %v509
        %v511 = vrot.slane %v372, %v510
        %v512 = vlaneseq
        %v513 = vshrl.u32 %v512, 7
        %v514 = vsub.s32 %v138, %v513
        %v515 = vrot.slane %v375, %v514
        %v516 = vlaneseq
        %v517 = vshrl.u32 %v516, 7
        %v518 = vsub.s32 %v138, %v517
        %v519 = vrot.slane %v378, %v518
        %v520 = vlaneseq
        %v521 = vshrl.u32 %v520, 7
        %v522 = vsub.s32 %v138, %v521
        %v523 = vrot.slane %v381, %v522
        %v524 = vlaneseq
        %v525 = vshrl.u32 %v524, 7
        %v526 = vsub.s32 %v138, %v525
        %v527 = vrot.slane %v384, %v526
        %v528 = vlaneseq
        %v529 = vshrl.u32 %v528, 7
        %v530 = vsub.s32 %v138, %v529
        %v531 = vrot.slane %v387, %v530
        %v532 = vlaneseq
        %v533 = vshrl.u32 %v532, 7
        %v534 = vsub.s32 %v138, %v533
        %v535 = vrot.slane %v390, %v534
        %v536 = vlaneseq
        %v537 = vshrl.u32 %v536, 7
        %v538 = vsub.s32 %v138, %v537
        %v539 = vrot.slane %v393, %v538
        %v540 = vlaneseq
        %v541 = vshrl.u32 %v540, 7
        %v542 = vsub.s32 %v138, %v541
        %v543 = vrot.slane %v396, %v542
        %v544 = vlaneseq
        %v545 = vshrl.u32 %v544, 7
        %v546 = vsub.s32 %v138, %v545
        %v547 = vrot.slane %v399, %v546
        %v548 = vlaneseq
        %v549 = vshrl.u32 %v548, 7
        %v550 = vsub.s32 %v138, %v549
        %v551 = vrot.slane %v402, %v550
        %v552 = vlaneseq
        %v553 = vshrl.u32 %v552, 7
        %v554 = vsub.s32 %v138, %v553
        %v555 = vrot.slane %v405, %v554
        %v556 = vlaneseq
        %v557 = vshrl.u32 %v556, 7
        %v558 = vsub.s32 %v138, %v557
        %v559 = vrot.slane %v408, %v558
        %v560 = vlaneseq
        %v561 = vshrl.u32 %v560, 7
        %v562 = vsub.s32 %v138, %v561
        %v563 = vrot.slane %v411, %v562
        %v564 = vlaneseq
        %v565 = vshrl.u32 %v564, 7
        %v566 = vsub.s32 %v138, %v565
        %v567 = vrot.slane %v414, %v566
        %v568 = vlaneseq
        %v569 = vshrl.u32 %v568, 7
        %v570 = vsub.s32 %v138, %v569
        %v571 = vrot.slane %v417, %v570
        %v572 = vlaneseq
        %v573 = vshrl.u32 %v572, 7
        %v574 = vsub.s32 %v138, %v573
        %v575 = vrot.slane %v420, %v574
        %v576 = vlaneseq
        %v577 = vshrl.u32 %v576, 7
        %v578 = vsub.s32 %v138, %v577
        %v579 = vrot.slane %v423, %v578
        %v580 = vlaneseq
        %v581 = vshrl.u32 %v580, 7
        %v582 = vsub.s32 %v138, %v581
        %v583 = vrot.slane %v426, %v582
        %v584 = vlaneseq
        %v585 = vshrl.u32 %v584, 7
        %v586 = vsub.s32 %v138, %v585
        %v587 = vrot.slane %v429, %v586
        %v588 = vlaneseq
        %v589 = vshrl.u32 %v588, 7
        %v590 = vsub.s32 %v138, %v589
        %v591 = vrot.slane %v432, %v590
        %v592 = vlaneseq
        %v593 = vshrl.u32 %v592, 7
        %v594 = vsub.s32 %v138, %v593
        %v595 = vrot.slane %v435, %v594
        %vm596 = vcmask 1041409
        %v597 = vsel %vm596, %v475, %v471
        %vm598 = vcmask 1042434
        %v599 = vsel %vm598, %v479, %v597
        %vm600 = vcmask 1043459
        %v601 = vsel %vm600, %v483, %v599
        %vm602 = vcmask 1044484
        %v603 = vsel %vm602, %v487, %v601
        %vm604 = vcmask 1045509
        %v605 = vsel %vm604, %v491, %v603
        %vm606 = vcmask 1046534
        %v607 = vsel %vm606, %v495, %v605
        %vm608 = vcmask 1047559
        %v609 = vsel %vm608, %v499, %v607
        %v610 = vsel %vm596, %v507, %v503
        %v611 = vsel %vm598, %v511, %v610
        %v612 = vsel %vm600, %v515, %v611
        %v613 = vsel %vm602, %v519, %v612
        %v614 = vsel %vm604, %v523, %v613
        %v615 = vsel %vm606, %v527, %v614
        %v616 = vsel %vm608, %v531, %v615
        %v617 = vsel %vm596, %v539, %v535
        %v618 = vsel %vm598, %v543, %v617
        %v619 = vsel %vm600, %v547, %v618
        %v620 = vsel %vm602, %v551, %v619
        %v621 = vsel %vm604, %v555, %v620
        %v622 = vsel %vm606, %v559, %v621
        %v623 = vsel %vm608, %v563, %v622
        %v624 = vsel %vm596, %v571, %v567
        %v625 = vsel %vm598, %v575, %v624
        %v626 = vsel %vm600, %v579, %v625
        %v627 = vsel %vm602, %v583, %v626
        %v628 = vsel %vm604, %v587, %v627
        %v629 = vsel %vm606, %v591, %v628
        %v630 = vsel %vm608, %v595, %v629
        %vm635 = vcmask 64512
        %636 = vst.msk [vmem:[%s134] sm:$0xff] %vm635, %v609
        %637 = vst.msk [vmem:[%s134 + $0x8] sm:$0xff] %vm635, %v616
        %638 = vst.msk [vmem:[%s134 + $0x10] sm:$0xff] %vm635, %v623
        %639 = vst.msk [vmem:[%s134 + $0x18] sm:$0xff] %vm635, %v630
        %v640 = vsel %vm144, 1, 0
        %vm641 = vcmp.eq.s32.totalorder %v640, 1
        %v642 = vsel %vm641, %v182, 0.0
        %v643 = vsel %vm641, %v186, 0.0
        %v644 = vsel %vm641, %v190, 0.0
        %v645 = vsel %vm641, %v194, 0.0
        %v646 = vsel %vm641, %v198, 0.0
        %v647 = vsel %vm641, %v202, 0.0
        %v648 = vsel %vm641, %v206, 0.0
        %v649 = vsel %vm641, %v210, 0.0
        %v650 = vsel %vm641, %v214, 0.0
        %v651 = vsel %vm641, %v218, 0.0
        %v652 = vsel %vm641, %v222, 0.0
        %v653 = vsel %vm641, %v226, 0.0
        %v654 = vsel %vm641, %v230, 0.0
        %v655 = vsel %vm641, %v234, 0.0
        %v656 = vsel %vm641, %v238, 0.0
        %v657 = vsel %vm641, %v242, 0.0
        %v658 = vsel %vm641, %v246, 0.0
        %v659 = vsel %vm641, %v250, 0.0
        %v660 = vsel %vm641, %v254, 0.0
        %v661 = vsel %vm641, %v258, 0.0
        %v662 = vsel %vm641, %v262, 0.0
        %v663 = vsel %vm641, %v266, 0.0
        %v664 = vsel %vm641, %v270, 0.0
        %v665 = vsel %vm641, %v274, 0.0
        %v666 = vsel %vm641, %v278, 0.0
        %v667 = vsel %vm641, %v282, 0.0
        %v668 = vsel %vm641, %v286, 0.0
        %v669 = vsel %vm641, %v290, 0.0
        %v670 = vsel %vm641, %v294, 0.0
        %v671 = vsel %vm641, %v298, 0.0
        %v672 = vsel %vm641, %v302, 0.0
        %v673 = vsel %vm641, %v306, 0.0
        %v674 = vsel %vm339, %v642, 0.0
        %675 = vadd.xlane.f32.xlu0 %v674
        %v676 = vpop.xlane.xlu0 %675
        %v677 = vsel %vm339, %v643, 0.0
        %678 = vadd.xlane.f32.xlu0 %v677
        %v679 = vpop.xlane.xlu0 %678
        %v680 = vsel %vm339, %v644, 0.0
        %681 = vadd.xlane.f32.xlu0 %v680
        %v682 = vpop.xlane.xlu0 %681
        %v683 = vsel %vm339, %v645, 0.0
        %684 = vadd.xlane.f32.xlu0 %v683
        %v685 = vpop.xlane.xlu0 %684
        %v686 = vsel %vm339, %v646, 0.0
        %687 = vadd.xlane.f32.xlu0 %v686
        %v688 = vpop.xlane.xlu0 %687
        %v689 = vsel %vm339, %v647, 0.0
        %690 = vadd.xlane.f32.xlu0 %v689
        %v691 = vpop.xlane.xlu0 %690
        %v692 = vsel %vm339, %v648, 0.0
        %693 = vadd.xlane.f32.xlu0 %v692
        %v694 = vpop.xlane.xlu0 %693
        %v695 = vsel %vm339, %v649, 0.0
        %696 = vadd.xlane.f32.xlu0 %v695
        %v697 = vpop.xlane.xlu0 %696
        %v698 = vsel %vm339, %v650, 0.0
        %699 = vadd.xlane.f32.xlu0 %v698
        %v700 = vpop.xlane.xlu0 %699
        %v701 = vsel %vm339, %v651, 0.0
        %702 = vadd.xlane.f32.xlu0 %v701
        %v703 = vpop.xlane.xlu0 %702
        %v704 = vsel %vm339, %v652, 0.0
        %705 = vadd.xlane.f32.xlu0 %v704
        %v706 = vpop.xlane.xlu0 %705
        %v707 = vsel %vm339, %v653, 0.0
        %708 = vadd.xlane.f32.xlu0 %v707
        %v709 = vpop.xlane.xlu0 %708
        %v710 = vsel %vm339, %v654, 0.0
        %711 = vadd.xlane.f32.xlu0 %v710
        %v712 = vpop.xlane.xlu0 %711
        %v713 = vsel %vm339, %v655, 0.0
        %714 = vadd.xlane.f32.xlu0 %v713
        %v715 = vpop.xlane.xlu0 %714
        %v716 = vsel %vm339, %v656, 0.0
        %717 = vadd.xlane.f32.xlu0 %v716
        %v718 = vpop.xlane.xlu0 %717
        %v719 = vsel %vm339, %v657, 0.0
        %720 = vadd.xlane.f32.xlu0 %v719
        %v721 = vpop.xlane.xlu0 %720
        %v722 = vsel %vm339, %v658, 0.0
        %723 = vadd.xlane.f32.xlu0 %v722
        %v724 = vpop.xlane.xlu0 %723
        %v725 = vsel %vm339, %v659, 0.0
        %726 = vadd.xlane.f32.xlu0 %v725
        %v727 = vpop.xlane.xlu0 %726
        %v728 = vsel %vm339, %v660, 0.0
        %729 = vadd.xlane.f32.xlu0 %v728
        %v730 = vpop.xlane.xlu0 %729
        %v731 = vsel %vm339, %v661, 0.0
        %732 = vadd.xlane.f32.xlu0 %v731
        %v733 = vpop.xlane.xlu0 %732
        %v734 = vsel %vm339, %v662, 0.0
        %735 = vadd.xlane.f32.xlu0 %v734
        %v736 = vpop.xlane.xlu0 %735
        %v737 = vsel %vm339, %v663, 0.0
        %738 = vadd.xlane.f32.xlu0 %v737
        %v739 = vpop.xlane.xlu0 %738
        %v740 = vsel %vm339, %v664, 0.0
        %741 = vadd.xlane.f32.xlu0 %v740
        %v742 = vpop.xlane.xlu0 %741
        %v743 = vsel %vm339, %v665, 0.0
        %744 = vadd.xlane.f32.xlu0 %v743
        %v745 = vpop.xlane.xlu0 %744
        %v746 = vsel %vm339, %v666, 0.0
        %747 = vadd.xlane.f32.xlu0 %v746
        %v748 = vpop.xlane.xlu0 %747
        %v749 = vsel %vm339, %v667, 0.0
        %750 = vadd.xlane.f32.xlu0 %v749
        %v751 = vpop.xlane.xlu0 %750
        %v752 = vsel %vm339, %v668, 0.0
        %753 = vadd.xlane.f32.xlu0 %v752
        %v754 = vpop.xlane.xlu0 %753
        %v755 = vsel %vm339, %v669, 0.0
        %756 = vadd.xlane.f32.xlu0 %v755
        %v757 = vpop.xlane.xlu0 %756
        %v758 = vsel %vm339, %v670, 0.0
        %759 = vadd.xlane.f32.xlu0 %v758
        %v760 = vpop.xlane.xlu0 %759
        %v761 = vsel %vm339, %v671, 0.0
        %762 = vadd.xlane.f32.xlu0 %v761
        %v763 = vpop.xlane.xlu0 %762
        %v764 = vsel %vm339, %v672, 0.0
        %765 = vadd.xlane.f32.xlu0 %v764
        %v766 = vpop.xlane.xlu0 %765
        %v767 = vsel %vm339, %v673, 0.0
        %768 = vadd.xlane.f32.xlu0 %v767
        %v769 = vpop.xlane.xlu0 %768
        %v802 = vlaneseq
        %v803 = vshrl.u32 %v802, 7
        %v804 = vsub.s32 %v138, %v803
        %v805 = vrot.slane %v676, %v804
        %v806 = vlaneseq
        %v807 = vshrl.u32 %v806, 7
        %v808 = vsub.s32 %v138, %v807
        %v809 = vrot.slane %v679, %v808
        %v810 = vlaneseq
        %v811 = vshrl.u32 %v810, 7
        %v812 = vsub.s32 %v138, %v811
        %v813 = vrot.slane %v682, %v812
        %v814 = vlaneseq
        %v815 = vshrl.u32 %v814, 7
        %v816 = vsub.s32 %v138, %v815
        %v817 = vrot.slane %v685, %v816
        %v818 = vlaneseq
        %v819 = vshrl.u32 %v818, 7
        %v820 = vsub.s32 %v138, %v819
        %v821 = vrot.slane %v688, %v820
        %v822 = vlaneseq
        %v823 = vshrl.u32 %v822, 7
        %v824 = vsub.s32 %v138, %v823
        %v825 = vrot.slane %v691, %v824
        %v826 = vlaneseq
        %v827 = vshrl.u32 %v826, 7
        %v828 = vsub.s32 %v138, %v827
        %v829 = vrot.slane %v694, %v828
        %v830 = vlaneseq
        %v831 = vshrl.u32 %v830, 7
        %v832 = vsub.s32 %v138, %v831
        %v833 = vrot.slane %v697, %v832
        %v834 = vlaneseq
        %v835 = vshrl.u32 %v834, 7
        %v836 = vsub.s32 %v138, %v835
        %v837 = vrot.slane %v700, %v836
        %v838 = vlaneseq
        %v839 = vshrl.u32 %v838, 7
        %v840 = vsub.s32 %v138, %v839
        %v841 = vrot.slane %v703, %v840
        %v842 = vlaneseq
        %v843 = vshrl.u32 %v842, 7
        %v844 = vsub.s32 %v138, %v843
        %v845 = vrot.slane %v706, %v844
        %v846 = vlaneseq
        %v847 = vshrl.u32 %v846, 7
        %v848 = vsub.s32 %v138, %v847
        %v849 = vrot.slane %v709, %v848
        %v850 = vlaneseq
        %v851 = vshrl.u32 %v850, 7
        %v852 = vsub.s32 %v138, %v851
        %v853 = vrot.slane %v712, %v852
        %v854 = vlaneseq
        %v855 = vshrl.u32 %v854, 7
        %v856 = vsub.s32 %v138, %v855
        %v857 = vrot.slane %v715, %v856
        %v858 = vlaneseq
        %v859 = vshrl.u32 %v858, 7
        %v860 = vsub.s32 %v138, %v859
        %v861 = vrot.slane %v718, %v860
        %v862 = vlaneseq
        %v863 = vshrl.u32 %v862, 7
        %v864 = vsub.s32 %v138, %v863
        %v865 = vrot.slane %v721, %v864
        %v866 = vlaneseq
        %v867 = vshrl.u32 %v866, 7
        %v868 = vsub.s32 %v138, %v867
        %v869 = vrot.slane %v724, %v868
        %v870 = vlaneseq
        %v871 = vshrl.u32 %v870, 7
        %v872 = vsub.s32 %v138, %v871
        %v873 = vrot.slane %v727, %v872
        %v874 = vlaneseq
        %v875 = vshrl.u32 %v874, 7
        %v876 = vsub.s32 %v138, %v875
        %v877 = vrot.slane %v730, %v876
        %v878 = vlaneseq
        %v879 = vshrl.u32 %v878, 7
        %v880 = vsub.s32 %v138, %v879
        %v881 = vrot.slane %v733, %v880
        %v882 = vlaneseq
        %v883 = vshrl.u32 %v882, 7
        %v884 = vsub.s32 %v138, %v883
        %v885 = vrot.slane %v736, %v884
        %v886 = vlaneseq
        %v887 = vshrl.u32 %v886, 7
        %v888 = vsub.s32 %v138, %v887
        %v889 = vrot.slane %v739, %v888
        %v890 = vlaneseq
        %v891 = vshrl.u32 %v890, 7
        %v892 = vsub.s32 %v138, %v891
        %v893 = vrot.slane %v742, %v892
        %v894 = vlaneseq
        %v895 = vshrl.u32 %v894, 7
        %v896 = vsub.s32 %v138, %v895
        %v897 = vrot.slane %v745, %v896
        %v898 = vlaneseq
        %v899 = vshrl.u32 %v898, 7
        %v900 = vsub.s32 %v138, %v899
        %v901 = vrot.slane %v748, %v900
        %v902 = vlaneseq
        %v903 = vshrl.u32 %v902, 7
        %v904 = vsub.s32 %v138, %v903
        %v905 = vrot.slane %v751, %v904
        %v906 = vlaneseq
        %v907 = vshrl.u32 %v906, 7
        %v908 = vsub.s32 %v138, %v907
        %v909 = vrot.slane %v754, %v908
        %v910 = vlaneseq
        %v911 = vshrl.u32 %v910, 7
        %v912 = vsub.s32 %v138, %v911
        %v913 = vrot.slane %v757, %v912
        %v914 = vlaneseq
        %v915 = vshrl.u32 %v914, 7
        %v916 = vsub.s32 %v138, %v915
        %v917 = vrot.slane %v760, %v916
        %v918 = vlaneseq
        %v919 = vshrl.u32 %v918, 7
        %v920 = vsub.s32 %v138, %v919
        %v921 = vrot.slane %v763, %v920
        %v922 = vlaneseq
        %v923 = vshrl.u32 %v922, 7
        %v924 = vsub.s32 %v138, %v923
        %v925 = vrot.slane %v766, %v924
        %v926 = vlaneseq
        %v927 = vshrl.u32 %v926, 7
        %v928 = vsub.s32 %v138, %v927
        %v929 = vrot.slane %v769, %v928
        %v930 = vsel %vm596, %v809, %v805
        %v931 = vsel %vm598, %v813, %v930
        %v932 = vsel %vm600, %v817, %v931
        %v933 = vsel %vm602, %v821, %v932
        %v934 = vsel %vm604, %v825, %v933
        %v935 = vsel %vm606, %v829, %v934
        %v936 = vsel %vm608, %v833, %v935
        %v937 = vsel %vm596, %v841, %v837
        %v938 = vsel %vm598, %v845, %v937
        %v939 = vsel %vm600, %v849, %v938
        %v940 = vsel %vm602, %v853, %v939
        %v941 = vsel %vm604, %v857, %v940
        %v942 = vsel %vm606, %v861, %v941
        %v943 = vsel %vm608, %v865, %v942
        %v944 = vsel %vm596, %v873, %v869
        %v945 = vsel %vm598, %v877, %v944
        %v946 = vsel %vm600, %v881, %v945
        %v947 = vsel %vm602, %v885, %v946
        %v948 = vsel %vm604, %v889, %v947
        %v949 = vsel %vm606, %v893, %v948
        %v950 = vsel %vm608, %v897, %v949
        %v951 = vsel %vm596, %v905, %v901
        %v952 = vsel %vm598, %v909, %v951
        %v953 = vsel %vm600, %v913, %v952
        %v954 = vsel %vm602, %v917, %v953
        %v955 = vsel %vm604, %v921, %v954
        %v956 = vsel %vm606, %v925, %v955
        %v957 = vsel %vm608, %v929, %v956
        %s962 = scalar_lea.vmem %s134, 32 [#allocation5]
        %963 = vst.msk [vmem:[%s962] sm:$0xff] %vm635, %v936
        %964 = vst.msk [vmem:[%s962 + $0x8] sm:$0xff] %vm635, %v943
        %965 = vst.msk [vmem:[%s962 + $0x10] sm:$0xff] %vm635, %v950
        %966 = vst.msk [vmem:[%s962 + $0x18] sm:$0xff] %vm635, %v957
        %v967 = vld [vmem:[%s116 + $0x1] sm:$0x1]
        %v968 = vld [vmem:[%s116 + $0x3] sm:$0x1]
        %v969 = vld [vmem:[%s116 + $0x5] sm:$0x1]
        %v970 = vld [vmem:[%s116 + $0x7] sm:$0x1]
        %v971 = vld [vmem:[%s116 + $0x9] sm:$0x1]
        %v972 = vld [vmem:[%s116 + $0xb] sm:$0x1]
        %v973 = vld [vmem:[%s116 + $0xd] sm:$0x1]
        %v974 = vld [vmem:[%s116 + $0xf] sm:$0x1]
        %v975 = vld [vmem:[%s116 + $0x11] sm:$0x1]
        %v976 = vld [vmem:[%s116 + $0x13] sm:$0x1]
        %v977 = vld [vmem:[%s116 + $0x15] sm:$0x1]
        %v978 = vld [vmem:[%s116 + $0x17] sm:$0x1]
        %v979 = vld [vmem:[%s116 + $0x19] sm:$0x1]
        %v980 = vld [vmem:[%s116 + $0x1b] sm:$0x1]
        %v981 = vld [vmem:[%s116 + $0x1d] sm:$0x1]
        %v982 = vld [vmem:[%s116 + $0x1f] sm:$0x1]
        %v983 = vld [vmem:[%s116 + $0x21] sm:$0x1]
        %v984 = vld [vmem:[%s116 + $0x23] sm:$0x1]
        %v985 = vld [vmem:[%s116 + $0x25] sm:$0x1]
        %v986 = vld [vmem:[%s116 + $0x27] sm:$0x1]
        %v987 = vld [vmem:[%s116 + $0x29] sm:$0x1]
        %v988 = vld [vmem:[%s116 + $0x2b] sm:$0x1]
        %v989 = vld [vmem:[%s116 + $0x2d] sm:$0x1]
        %v990 = vld [vmem:[%s116 + $0x2f] sm:$0x1]
        %v991 = vld [vmem:[%s116 + $0x31] sm:$0x1]
        %v992 = vld [vmem:[%s116 + $0x33] sm:$0x1]
        %v993 = vld [vmem:[%s116 + $0x35] sm:$0x1]
        %v994 = vld [vmem:[%s116 + $0x37] sm:$0x1]
        %v995 = vld [vmem:[%s116 + $0x39] sm:$0x1]
        %v996 = vld [vmem:[%s116 + $0x3b] sm:$0x1]
        %v997 = vld [vmem:[%s116 + $0x3d] sm:$0x1]
        %v998 = vld [vmem:[%s116 + $0x3f] sm:$0x1]
        %v999 = vlaneseq
        %v1000 = vshrl.u32 %v999, 7
        %v1001 = vsub.s32 0, %v1000
        %v1002 = vrot.slane %v967, %v1001
        %v1003 = vlaneseq
        %v1004 = vshrl.u32 %v1003, 7
        %v1005 = vsub.s32 0, %v1004
        %v1006 = vrot.slane %v968, %v1005
        %v1007 = vlaneseq
        %v1008 = vshrl.u32 %v1007, 7
        %v1009 = vsub.s32 0, %v1008
        %v1010 = vrot.slane %v969, %v1009
        %v1011 = vlaneseq
        %v1012 = vshrl.u32 %v1011, 7
        %v1013 = vsub.s32 0, %v1012
        %v1014 = vrot.slane %v970, %v1013
        %v1015 = vlaneseq
        %v1016 = vshrl.u32 %v1015, 7
        %v1017 = vsub.s32 0, %v1016
        %v1018 = vrot.slane %v971, %v1017
        %v1019 = vlaneseq
        %v1020 = vshrl.u32 %v1019, 7
        %v1021 = vsub.s32 0, %v1020
        %v1022 = vrot.slane %v972, %v1021
        %v1023 = vlaneseq
        %v1024 = vshrl.u32 %v1023, 7
        %v1025 = vsub.s32 0, %v1024
        %v1026 = vrot.slane %v973, %v1025
        %v1027 = vlaneseq
        %v1028 = vshrl.u32 %v1027, 7
        %v1029 = vsub.s32 0, %v1028
        %v1030 = vrot.slane %v974, %v1029
        %v1031 = vlaneseq
        %v1032 = vshrl.u32 %v1031, 7
        %v1033 = vsub.s32 0, %v1032
        %v1034 = vrot.slane %v975, %v1033
        %v1035 = vlaneseq
        %v1036 = vshrl.u32 %v1035, 7
        %v1037 = vsub.s32 0, %v1036
        %v1038 = vrot.slane %v976, %v1037
        %v1039 = vlaneseq
        %v1040 = vshrl.u32 %v1039, 7
        %v1041 = vsub.s32 0, %v1040
        %v1042 = vrot.slane %v977, %v1041
        %v1043 = vlaneseq
        %v1044 = vshrl.u32 %v1043, 7
        %v1045 = vsub.s32 0, %v1044
        %v1046 = vrot.slane %v978, %v1045
        %v1047 = vlaneseq
        %v1048 = vshrl.u32 %v1047, 7
        %v1049 = vsub.s32 0, %v1048
        %v1050 = vrot.slane %v979, %v1049
        %v1051 = vlaneseq
        %v1052 = vshrl.u32 %v1051, 7
        %v1053 = vsub.s32 0, %v1052
        %v1054 = vrot.slane %v980, %v1053
        %v1055 = vlaneseq
        %v1056 = vshrl.u32 %v1055, 7
        %v1057 = vsub.s32 0, %v1056
        %v1058 = vrot.slane %v981, %v1057
        %v1059 = vlaneseq
        %v1060 = vshrl.u32 %v1059, 7
        %v1061 = vsub.s32 0, %v1060
        %v1062 = vrot.slane %v982, %v1061
        %v1063 = vlaneseq
        %v1064 = vshrl.u32 %v1063, 7
        %v1065 = vsub.s32 0, %v1064
        %v1066 = vrot.slane %v983, %v1065
        %v1067 = vlaneseq
        %v1068 = vshrl.u32 %v1067, 7
        %v1069 = vsub.s32 0, %v1068
        %v1070 = vrot.slane %v984, %v1069
        %v1071 = vlaneseq
        %v1072 = vshrl.u32 %v1071, 7
        %v1073 = vsub.s32 0, %v1072
        %v1074 = vrot.slane %v985, %v1073
        %v1075 = vlaneseq
        %v1076 = vshrl.u32 %v1075, 7
        %v1077 = vsub.s32 0, %v1076
        %v1078 = vrot.slane %v986, %v1077
        %v1079 = vlaneseq
        %v1080 = vshrl.u32 %v1079, 7
        %v1081 = vsub.s32 0, %v1080
        %v1082 = vrot.slane %v987, %v1081
        %v1083 = vlaneseq
        %v1084 = vshrl.u32 %v1083, 7
        %v1085 = vsub.s32 0, %v1084
        %v1086 = vrot.slane %v988, %v1085
        %v1087 = vlaneseq
        %v1088 = vshrl.u32 %v1087, 7
        %v1089 = vsub.s32 0, %v1088
        %v1090 = vrot.slane %v989, %v1089
        %v1091 = vlaneseq
        %v1092 = vshrl.u32 %v1091, 7
        %v1093 = vsub.s32 0, %v1092
        %v1094 = vrot.slane %v990, %v1093
        %v1095 = vlaneseq
        %v1096 = vshrl.u32 %v1095, 7
        %v1097 = vsub.s32 0, %v1096
        %v1098 = vrot.slane %v991, %v1097
        %v1099 = vlaneseq
        %v1100 = vshrl.u32 %v1099, 7
        %v1101 = vsub.s32 0, %v1100
        %v1102 = vrot.slane %v992, %v1101
        %v1103 = vlaneseq
        %v1104 = vshrl.u32 %v1103, 7
        %v1105 = vsub.s32 0, %v1104
        %v1106 = vrot.slane %v993, %v1105
        %v1107 = vlaneseq
        %v1108 = vshrl.u32 %v1107, 7
        %v1109 = vsub.s32 0, %v1108
        %v1110 = vrot.slane %v994, %v1109
        %v1111 = vlaneseq
        %v1112 = vshrl.u32 %v1111, 7
        %v1113 = vsub.s32 0, %v1112
        %v1114 = vrot.slane %v995, %v1113
        %v1115 = vlaneseq
        %v1116 = vshrl.u32 %v1115, 7
        %v1117 = vsub.s32 0, %v1116
        %v1118 = vrot.slane %v996, %v1117
        %v1119 = vlaneseq
        %v1120 = vshrl.u32 %v1119, 7
        %v1121 = vsub.s32 0, %v1120
        %v1122 = vrot.slane %v997, %v1121
        %v1123 = vlaneseq
        %v1124 = vshrl.u32 %v1123, 7
        %v1125 = vsub.s32 0, %v1124
        %v1126 = vrot.slane %v998, %v1125
        %v1127 = vsel %vm178, %v1002, 0.0
        %v1128 = vsel %vm178, %v1006, 0.0
        %v1129 = vsel %vm178, %v1010, 0.0
        %v1130 = vsel %vm178, %v1014, 0.0
        %v1131 = vsel %vm178, %v1018, 0.0
        %v1132 = vsel %vm178, %v1022, 0.0
        %v1133 = vsel %vm178, %v1026, 0.0
        %v1134 = vsel %vm178, %v1030, 0.0
        %v1135 = vsel %vm178, %v1034, 0.0
        %v1136 = vsel %vm178, %v1038, 0.0
        %v1137 = vsel %vm178, %v1042, 0.0
        %v1138 = vsel %vm178, %v1046, 0.0
        %v1139 = vsel %vm178, %v1050, 0.0
        %v1140 = vsel %vm178, %v1054, 0.0
        %v1141 = vsel %vm178, %v1058, 0.0
        %v1142 = vsel %vm178, %v1062, 0.0
        %v1143 = vsel %vm178, %v1066, 0.0
        %v1144 = vsel %vm178, %v1070, 0.0
        %v1145 = vsel %vm178, %v1074, 0.0
        %v1146 = vsel %vm178, %v1078, 0.0
        %v1147 = vsel %vm178, %v1082, 0.0
        %v1148 = vsel %vm178, %v1086, 0.0
        %v1149 = vsel %vm178, %v1090, 0.0
        %v1150 = vsel %vm178, %v1094, 0.0
        %v1151 = vsel %vm178, %v1098, 0.0
        %v1152 = vsel %vm178, %v1102, 0.0
        %v1153 = vsel %vm178, %v1106, 0.0
        %v1154 = vsel %vm178, %v1110, 0.0
        %v1155 = vsel %vm178, %v1114, 0.0
        %v1156 = vsel %vm178, %v1118, 0.0
        %v1157 = vsel %vm178, %v1122, 0.0
        %v1158 = vsel %vm178, %v1126, 0.0
        %v1159 = vsel %vm339, %v1127, 0.0
        %1160 = vadd.xlane.f32.xlu0 %v1159
        %v1161 = vpop.xlane.xlu0 %1160
        %v1162 = vsel %vm339, %v1128, 0.0
        %1163 = vadd.xlane.f32.xlu0 %v1162
        %v1164 = vpop.xlane.xlu0 %1163
        %v1165 = vsel %vm339, %v1129, 0.0
        %1166 = vadd.xlane.f32.xlu0 %v1165
        %v1167 = vpop.xlane.xlu0 %1166
        %v1168 = vsel %vm339, %v1130, 0.0
        %1169 = vadd.xlane.f32.xlu0 %v1168
        %v1170 = vpop.xlane.xlu0 %1169
        %v1171 = vsel %vm339, %v1131, 0.0
        %1172 = vadd.xlane.f32.xlu0 %v1171
        %v1173 = vpop.xlane.xlu0 %1172
        %v1174 = vsel %vm339, %v1132, 0.0
        %1175 = vadd.xlane.f32.xlu0 %v1174
        %v1176 = vpop.xlane.xlu0 %1175
        %v1177 = vsel %vm339, %v1133, 0.0
        %1178 = vadd.xlane.f32.xlu0 %v1177
        %v1179 = vpop.xlane.xlu0 %1178
        %v1180 = vsel %vm339, %v1134, 0.0
        %1181 = vadd.xlane.f32.xlu0 %v1180
        %v1182 = vpop.xlane.xlu0 %1181
        %v1183 = vsel %vm339, %v1135, 0.0
        %1184 = vadd.xlane.f32.xlu0 %v1183
        %v1185 = vpop.xlane.xlu0 %1184
        %v1186 = vsel %vm339, %v1136, 0.0
        %1187 = vadd.xlane.f32.xlu0 %v1186
        %v1188 = vpop.xlane.xlu0 %1187
        %v1189 = vsel %vm339, %v1137, 0.0
        %1190 = vadd.xlane.f32.xlu0 %v1189
        %v1191 = vpop.xlane.xlu0 %1190
        %v1192 = vsel %vm339, %v1138, 0.0
        %1193 = vadd.xlane.f32.xlu0 %v1192
        %v1194 = vpop.xlane.xlu0 %1193
        %v1195 = vsel %vm339, %v1139, 0.0
        %1196 = vadd.xlane.f32.xlu0 %v1195
        %v1197 = vpop.xlane.xlu0 %1196
        %v1198 = vsel %vm339, %v1140, 0.0
        %1199 = vadd.xlane.f32.xlu0 %v1198
        %v1200 = vpop.xlane.xlu0 %1199
        %v1201 = vsel %vm339, %v1141, 0.0
        %1202 = vadd.xlane.f32.xlu0 %v1201
        %v1203 = vpop.xlane.xlu0 %1202
        %v1204 = vsel %vm339, %v1142, 0.0
        %1205 = vadd.xlane.f32.xlu0 %v1204
        %v1206 = vpop.xlane.xlu0 %1205
        %v1207 = vsel %vm339, %v1143, 0.0
        %1208 = vadd.xlane.f32.xlu0 %v1207
        %v1209 = vpop.xlane.xlu0 %1208
        %v1210 = vsel %vm339, %v1144, 0.0
        %1211 = vadd.xlane.f32.xlu0 %v1210
        %v1212 = vpop.xlane.xlu0 %1211
        %v1213 = vsel %vm339, %v1145, 0.0
        %1214 = vadd.xlane.f32.xlu0 %v1213
        %v1215 = vpop.xlane.xlu0 %1214
        %v1216 = vsel %vm339, %v1146, 0.0
        %1217 = vadd.xlane.f32.xlu0 %v1216
        %v1218 = vpop.xlane.xlu0 %1217
        %v1219 = vsel %vm339, %v1147, 0.0
        %1220 = vadd.xlane.f32.xlu0 %v1219
        %v1221 = vpop.xlane.xlu0 %1220
        %v1222 = vsel %vm339, %v1148, 0.0
        %1223 = vadd.xlane.f32.xlu0 %v1222
        %v1224 = vpop.xlane.xlu0 %1223
        %v1225 = vsel %vm339, %v1149, 0.0
        %1226 = vadd.xlane.f32.xlu0 %v1225
        %v1227 = vpop.xlane.xlu0 %1226
        %v1228 = vsel %vm339, %v1150, 0.0
        %1229 = vadd.xlane.f32.xlu0 %v1228
        %v1230 = vpop.xlane.xlu0 %1229
        %v1231 = vsel %vm339, %v1151, 0.0
        %1232 = vadd.xlane.f32.xlu0 %v1231
        %v1233 = vpop.xlane.xlu0 %1232
        %v1234 = vsel %vm339, %v1152, 0.0
        %1235 = vadd.xlane.f32.xlu0 %v1234
        %v1236 = vpop.xlane.xlu0 %1235
        %v1237 = vsel %vm339, %v1153, 0.0
        %1238 = vadd.xlane.f32.xlu0 %v1237
        %v1239 = vpop.xlane.xlu0 %1238
        %v1240 = vsel %vm339, %v1154, 0.0
        %1241 = vadd.xlane.f32.xlu0 %v1240
        %v1242 = vpop.xlane.xlu0 %1241
        %v1243 = vsel %vm339, %v1155, 0.0
        %1244 = vadd.xlane.f32.xlu0 %v1243
        %v1245 = vpop.xlane.xlu0 %1244
        %v1246 = vsel %vm339, %v1156, 0.0
        %1247 = vadd.xlane.f32.xlu0 %v1246
        %v1248 = vpop.xlane.xlu0 %1247
        %v1249 = vsel %vm339, %v1157, 0.0
        %1250 = vadd.xlane.f32.xlu0 %v1249
        %v1251 = vpop.xlane.xlu0 %1250
        %v1252 = vsel %vm339, %v1158, 0.0
        %1253 = vadd.xlane.f32.xlu0 %v1252
        %v1254 = vpop.xlane.xlu0 %1253
        %v1287 = vlaneseq
        %v1288 = vshrl.u32 %v1287, 7
        %v1289 = vsub.s32 %v138, %v1288
        %v1290 = vrot.slane %v1161, %v1289
        %v1291 = vlaneseq
        %v1292 = vshrl.u32 %v1291, 7
        %v1293 = vsub.s32 %v138, %v1292
        %v1294 = vrot.slane %v1164, %v1293
        %v1295 = vlaneseq
        %v1296 = vshrl.u32 %v1295, 7
        %v1297 = vsub.s32 %v138, %v1296
        %v1298 = vrot.slane %v1167, %v1297
        %v1299 = vlaneseq
        %v1300 = vshrl.u32 %v1299, 7
        %v1301 = vsub.s32 %v138, %v1300
        %v1302 = vrot.slane %v1170, %v1301
        %v1303 = vlaneseq
        %v1304 = vshrl.u32 %v1303, 7
        %v1305 = vsub.s32 %v138, %v1304
        %v1306 = vrot.slane %v1173, %v1305
        %v1307 = vlaneseq
        %v1308 = vshrl.u32 %v1307, 7
        %v1309 = vsub.s32 %v138, %v1308
        %v1310 = vrot.slane %v1176, %v1309
        %v1311 = vlaneseq
        %v1312 = vshrl.u32 %v1311, 7
        %v1313 = vsub.s32 %v138, %v1312
        %v1314 = vrot.slane %v1179, %v1313
        %v1315 = vlaneseq
        %v1316 = vshrl.u32 %v1315, 7
        %v1317 = vsub.s32 %v138, %v1316
        %v1318 = vrot.slane %v1182, %v1317
        %v1319 = vlaneseq
        %v1320 = vshrl.u32 %v1319, 7
        %v1321 = vsub.s32 %v138, %v1320
        %v1322 = vrot.slane %v1185, %v1321
        %v1323 = vlaneseq
        %v1324 = vshrl.u32 %v1323, 7
        %v1325 = vsub.s32 %v138, %v1324
        %v1326 = vrot.slane %v1188, %v1325
        %v1327 = vlaneseq
        %v1328 = vshrl.u32 %v1327, 7
        %v1329 = vsub.s32 %v138, %v1328
        %v1330 = vrot.slane %v1191, %v1329
        %v1331 = vlaneseq
        %v1332 = vshrl.u32 %v1331, 7
        %v1333 = vsub.s32 %v138, %v1332
        %v1334 = vrot.slane %v1194, %v1333
        %v1335 = vlaneseq
        %v1336 = vshrl.u32 %v1335, 7
        %v1337 = vsub.s32 %v138, %v1336
        %v1338 = vrot.slane %v1197, %v1337
        %v1339 = vlaneseq
        %v1340 = vshrl.u32 %v1339, 7
        %v1341 = vsub.s32 %v138, %v1340
        %v1342 = vrot.slane %v1200, %v1341
        %v1343 = vlaneseq
        %v1344 = vshrl.u32 %v1343, 7
        %v1345 = vsub.s32 %v138, %v1344
        %v1346 = vrot.slane %v1203, %v1345
        %v1347 = vlaneseq
        %v1348 = vshrl.u32 %v1347, 7
        %v1349 = vsub.s32 %v138, %v1348
        %v1350 = vrot.slane %v1206, %v1349
        %v1351 = vlaneseq
        %v1352 = vshrl.u32 %v1351, 7
        %v1353 = vsub.s32 %v138, %v1352
        %v1354 = vrot.slane %v1209, %v1353
        %v1355 = vlaneseq
        %v1356 = vshrl.u32 %v1355, 7
        %v1357 = vsub.s32 %v138, %v1356
        %v1358 = vrot.slane %v1212, %v1357
        %v1359 = vlaneseq
        %v1360 = vshrl.u32 %v1359, 7
        %v1361 = vsub.s32 %v138, %v1360
        %v1362 = vrot.slane %v1215, %v1361
        %v1363 = vlaneseq
        %v1364 = vshrl.u32 %v1363, 7
        %v1365 = vsub.s32 %v138, %v1364
        %v1366 = vrot.slane %v1218, %v1365
        %v1367 = vlaneseq
        %v1368 = vshrl.u32 %v1367, 7
        %v1369 = vsub.s32 %v138, %v1368
        %v1370 = vrot.slane %v1221, %v1369
        %v1371 = vlaneseq
        %v1372 = vshrl.u32 %v1371, 7
        %v1373 = vsub.s32 %v138, %v1372
        %v1374 = vrot.slane %v1224, %v1373
        %v1375 = vlaneseq
        %v1376 = vshrl.u32 %v1375, 7
        %v1377 = vsub.s32 %v138, %v1376
        %v1378 = vrot.slane %v1227, %v1377
        %v1379 = vlaneseq
        %v1380 = vshrl.u32 %v1379, 7
        %v1381 = vsub.s32 %v138, %v1380
        %v1382 = vrot.slane %v1230, %v1381
        %v1383 = vlaneseq
        %v1384 = vshrl.u32 %v1383, 7
        %v1385 = vsub.s32 %v138, %v1384
        %v1386 = vrot.slane %v1233, %v1385
        %v1387 = vlaneseq
        %v1388 = vshrl.u32 %v1387, 7
        %v1389 = vsub.s32 %v138, %v1388
        %v1390 = vrot.slane %v1236, %v1389
        %v1391 = vlaneseq
        %v1392 = vshrl.u32 %v1391, 7
        %v1393 = vsub.s32 %v138, %v1392
        %v1394 = vrot.slane %v1239, %v1393
        %v1395 = vlaneseq
        %v1396 = vshrl.u32 %v1395, 7
        %v1397 = vsub.s32 %v138, %v1396
        %v1398 = vrot.slane %v1242, %v1397
        %v1399 = vlaneseq
        %v1400 = vshrl.u32 %v1399, 7
        %v1401 = vsub.s32 %v138, %v1400
        %v1402 = vrot.slane %v1245, %v1401
        %v1403 = vlaneseq
        %v1404 = vshrl.u32 %v1403, 7
        %v1405 = vsub.s32 %v138, %v1404
        %v1406 = vrot.slane %v1248, %v1405
        %v1407 = vlaneseq
        %v1408 = vshrl.u32 %v1407, 7
        %v1409 = vsub.s32 %v138, %v1408
        %v1410 = vrot.slane %v1251, %v1409
        %v1411 = vlaneseq
        %v1412 = vshrl.u32 %v1411, 7
        %v1413 = vsub.s32 %v138, %v1412
        %v1414 = vrot.slane %v1254, %v1413
        %v1415 = vsel %vm596, %v1294, %v1290
        %v1416 = vsel %vm598, %v1298, %v1415
        %v1417 = vsel %vm600, %v1302, %v1416
        %v1418 = vsel %vm602, %v1306, %v1417
        %v1419 = vsel %vm604, %v1310, %v1418
        %v1420 = vsel %vm606, %v1314, %v1419
        %v1421 = vsel %vm608, %v1318, %v1420
        %v1422 = vsel %vm596, %v1326, %v1322
        %v1423 = vsel %vm598, %v1330, %v1422
        %v1424 = vsel %vm600, %v1334, %v1423
        %v1425 = vsel %vm602, %v1338, %v1424
        %v1426 = vsel %vm604, %v1342, %v1425
        %v1427 = vsel %vm606, %v1346, %v1426
        %v1428 = vsel %vm608, %v1350, %v1427
        %v1429 = vsel %vm596, %v1358, %v1354
        %v1430 = vsel %vm598, %v1362, %v1429
        %v1431 = vsel %vm600, %v1366, %v1430
        %v1432 = vsel %vm602, %v1370, %v1431
        %v1433 = vsel %vm604, %v1374, %v1432
        %v1434 = vsel %vm606, %v1378, %v1433
        %v1435 = vsel %vm608, %v1382, %v1434
        %v1436 = vsel %vm596, %v1390, %v1386
        %v1437 = vsel %vm598, %v1394, %v1436
        %v1438 = vsel %vm600, %v1398, %v1437
        %v1439 = vsel %vm602, %v1402, %v1438
        %v1440 = vsel %vm604, %v1406, %v1439
        %v1441 = vsel %vm606, %v1410, %v1440
        %v1442 = vsel %vm608, %v1414, %v1441
        %s1447 = scalar_lea.vmem %s134, 64 [#allocation5]
        %1448 = vst.msk [vmem:[%s1447] sm:$0xff] %vm635, %v1421
        %1449 = vst.msk [vmem:[%s1447 + $0x8] sm:$0xff] %vm635, %v1428
        %1450 = vst.msk [vmem:[%s1447 + $0x10] sm:$0xff] %vm635, %v1435
        %1451 = vst.msk [vmem:[%s1447 + $0x18] sm:$0xff] %vm635, %v1442
        %v1452 = vsel %vm641, %v1002, 0.0
        %v1453 = vsel %vm641, %v1006, 0.0
        %v1454 = vsel %vm641, %v1010, 0.0
        %v1455 = vsel %vm641, %v1014, 0.0
        %v1456 = vsel %vm641, %v1018, 0.0
        %v1457 = vsel %vm641, %v1022, 0.0
        %v1458 = vsel %vm641, %v1026, 0.0
        %v1459 = vsel %vm641, %v1030, 0.0
        %v1460 = vsel %vm641, %v1034, 0.0
        %v1461 = vsel %vm641, %v1038, 0.0
        %v1462 = vsel %vm641, %v1042, 0.0
        %v1463 = vsel %vm641, %v1046, 0.0
        %v1464 = vsel %vm641, %v1050, 0.0
        %v1465 = vsel %vm641, %v1054, 0.0
        %v1466 = vsel %vm641, %v1058, 0.0
        %v1467 = vsel %vm641, %v1062, 0.0
        %v1468 = vsel %vm641, %v1066, 0.0
        %v1469 = vsel %vm641, %v1070, 0.0
        %v1470 = vsel %vm641, %v1074, 0.0
        %v1471 = vsel %vm641, %v1078, 0.0
        %v1472 = vsel %vm641, %v1082, 0.0
        %v1473 = vsel %vm641, %v1086, 0.0
        %v1474 = vsel %vm641, %v1090, 0.0
        %v1475 = vsel %vm641, %v1094, 0.0
        %v1476 = vsel %vm641, %v1098, 0.0
        %v1477 = vsel %vm641, %v1102, 0.0
        %v1478 = vsel %vm641, %v1106, 0.0
        %v1479 = vsel %vm641, %v1110, 0.0
        %v1480 = vsel %vm641, %v1114, 0.0
        %v1481 = vsel %vm641, %v1118, 0.0
        %v1482 = vsel %vm641, %v1122, 0.0
        %v1483 = vsel %vm641, %v1126, 0.0
        %v1484 = vsel %vm339, %v1452, 0.0
        %1485 = vadd.xlane.f32.xlu0 %v1484
        %v1486 = vpop.xlane.xlu0 %1485
        %v1487 = vsel %vm339, %v1453, 0.0
        %1488 = vadd.xlane.f32.xlu0 %v1487
        %v1489 = vpop.xlane.xlu0 %1488
        %v1490 = vsel %vm339, %v1454, 0.0
        %1491 = vadd.xlane.f32.xlu0 %v1490
        %v1492 = vpop.xlane.xlu0 %1491
        %v1493 = vsel %vm339, %v1455, 0.0
        %1494 = vadd.xlane.f32.xlu0 %v1493
        %v1495 = vpop.xlane.xlu0 %1494
        %v1496 = vsel %vm339, %v1456, 0.0
        %1497 = vadd.xlane.f32.xlu0 %v1496
        %v1498 = vpop.xlane.xlu0 %1497
        %v1499 = vsel %vm339, %v1457, 0.0
        %1500 = vadd.xlane.f32.xlu0 %v1499
        %v1501 = vpop.xlane.xlu0 %1500
        %v1502 = vsel %vm339, %v1458, 0.0
        %1503 = vadd.xlane.f32.xlu0 %v1502
        %v1504 = vpop.xlane.xlu0 %1503
        %v1505 = vsel %vm339, %v1459, 0.0
        %1506 = vadd.xlane.f32.xlu0 %v1505
        %v1507 = vpop.xlane.xlu0 %1506
        %v1508 = vsel %vm339, %v1460, 0.0
        %1509 = vadd.xlane.f32.xlu0 %v1508
        %v1510 = vpop.xlane.xlu0 %1509
        %v1511 = vsel %vm339, %v1461, 0.0
        %1512 = vadd.xlane.f32.xlu0 %v1511
        %v1513 = vpop.xlane.xlu0 %1512
        %v1514 = vsel %vm339, %v1462, 0.0
        %1515 = vadd.xlane.f32.xlu0 %v1514
        %v1516 = vpop.xlane.xlu0 %1515
        %v1517 = vsel %vm339, %v1463, 0.0
        %1518 = vadd.xlane.f32.xlu0 %v1517
        %v1519 = vpop.xlane.xlu0 %1518
        %v1520 = vsel %vm339, %v1464, 0.0
        %1521 = vadd.xlane.f32.xlu0 %v1520
        %v1522 = vpop.xlane.xlu0 %1521
        %v1523 = vsel %vm339, %v1465, 0.0
        %1524 = vadd.xlane.f32.xlu0 %v1523
        %v1525 = vpop.xlane.xlu0 %1524
        %v1526 = vsel %vm339, %v1466, 0.0
        %1527 = vadd.xlane.f32.xlu0 %v1526
        %v1528 = vpop.xlane.xlu0 %1527
        %v1529 = vsel %vm339, %v1467, 0.0
        %1530 = vadd.xlane.f32.xlu0 %v1529
        %v1531 = vpop.xlane.xlu0 %1530
        %v1532 = vsel %vm339, %v1468, 0.0
        %1533 = vadd.xlane.f32.xlu0 %v1532
        %v1534 = vpop.xlane.xlu0 %1533
        %v1535 = vsel %vm339, %v1469, 0.0
        %1536 = vadd.xlane.f32.xlu0 %v1535
        %v1537 = vpop.xlane.xlu0 %1536
        %v1538 = vsel %vm339, %v1470, 0.0
        %1539 = vadd.xlane.f32.xlu0 %v1538
        %v1540 = vpop.xlane.xlu0 %1539
        %v1541 = vsel %vm339, %v1471, 0.0
        %1542 = vadd.xlane.f32.xlu0 %v1541
        %v1543 = vpop.xlane.xlu0 %1542
        %v1544 = vsel %vm339, %v1472, 0.0
        %1545 = vadd.xlane.f32.xlu0 %v1544
        %v1546 = vpop.xlane.xlu0 %1545
        %v1547 = vsel %vm339, %v1473, 0.0
        %1548 = vadd.xlane.f32.xlu0 %v1547
        %v1549 = vpop.xlane.xlu0 %1548
        %v1550 = vsel %vm339, %v1474, 0.0
        %1551 = vadd.xlane.f32.xlu0 %v1550
        %v1552 = vpop.xlane.xlu0 %1551
        %v1553 = vsel %vm339, %v1475, 0.0
        %1554 = vadd.xlane.f32.xlu0 %v1553
        %v1555 = vpop.xlane.xlu0 %1554
        %v1556 = vsel %vm339, %v1476, 0.0
        %1557 = vadd.xlane.f32.xlu0 %v1556
        %v1558 = vpop.xlane.xlu0 %1557
        %v1559 = vsel %vm339, %v1477, 0.0
        %1560 = vadd.xlane.f32.xlu0 %v1559
        %v1561 = vpop.xlane.xlu0 %1560
        %v1562 = vsel %vm339, %v1478, 0.0
        %1563 = vadd.xlane.f32.xlu0 %v1562
        %v1564 = vpop.xlane.xlu0 %1563
        %v1565 = vsel %vm339, %v1479, 0.0
        %1566 = vadd.xlane.f32.xlu0 %v1565
        %v1567 = vpop.xlane.xlu0 %1566
        %v1568 = vsel %vm339, %v1480, 0.0
        %1569 = vadd.xlane.f32.xlu0 %v1568
        %v1570 = vpop.xlane.xlu0 %1569
        %v1571 = vsel %vm339, %v1481, 0.0
        %1572 = vadd.xlane.f32.xlu0 %v1571
        %v1573 = vpop.xlane.xlu0 %1572
        %v1574 = vsel %vm339, %v1482, 0.0
        %1575 = vadd.xlane.f32.xlu0 %v1574
        %v1576 = vpop.xlane.xlu0 %1575
        %v1577 = vsel %vm339, %v1483, 0.0
        %1578 = vadd.xlane.f32.xlu0 %v1577
        %v1579 = vpop.xlane.xlu0 %1578
        %v1612 = vlaneseq
        %v1613 = vshrl.u32 %v1612, 7
        %v1614 = vsub.s32 %v138, %v1613
        %v1615 = vrot.slane %v1486, %v1614
        %v1616 = vlaneseq
        %v1617 = vshrl.u32 %v1616, 7
        %v1618 = vsub.s32 %v138, %v1617
        %v1619 = vrot.slane %v1489, %v1618
        %v1620 = vlaneseq
        %v1621 = vshrl.u32 %v1620, 7
        %v1622 = vsub.s32 %v138, %v1621
        %v1623 = vrot.slane %v1492, %v1622
        %v1624 = vlaneseq
        %v1625 = vshrl.u32 %v1624, 7
        %v1626 = vsub.s32 %v138, %v1625
        %v1627 = vrot.slane %v1495, %v1626
        %v1628 = vlaneseq
        %v1629 = vshrl.u32 %v1628, 7
        %v1630 = vsub.s32 %v138, %v1629
        %v1631 = vrot.slane %v1498, %v1630
        %v1632 = vlaneseq
        %v1633 = vshrl.u32 %v1632, 7
        %v1634 = vsub.s32 %v138, %v1633
        %v1635 = vrot.slane %v1501, %v1634
        %v1636 = vlaneseq
        %v1637 = vshrl.u32 %v1636, 7
        %v1638 = vsub.s32 %v138, %v1637
        %v1639 = vrot.slane %v1504, %v1638
        %v1640 = vlaneseq
        %v1641 = vshrl.u32 %v1640, 7
        %v1642 = vsub.s32 %v138, %v1641
        %v1643 = vrot.slane %v1507, %v1642
        %v1644 = vlaneseq
        %v1645 = vshrl.u32 %v1644, 7
        %v1646 = vsub.s32 %v138, %v1645
        %v1647 = vrot.slane %v1510, %v1646
        %v1648 = vlaneseq
        %v1649 = vshrl.u32 %v1648, 7
        %v1650 = vsub.s32 %v138, %v1649
        %v1651 = vrot.slane %v1513, %v1650
        %v1652 = vlaneseq
        %v1653 = vshrl.u32 %v1652, 7
        %v1654 = vsub.s32 %v138, %v1653
        %v1655 = vrot.slane %v1516, %v1654
        %v1656 = vlaneseq
        %v1657 = vshrl.u32 %v1656, 7
        %v1658 = vsub.s32 %v138, %v1657
        %v1659 = vrot.slane %v1519, %v1658
        %v1660 = vlaneseq
        %v1661 = vshrl.u32 %v1660, 7
        %v1662 = vsub.s32 %v138, %v1661
        %v1663 = vrot.slane %v1522, %v1662
        %v1664 = vlaneseq
        %v1665 = vshrl.u32 %v1664, 7
        %v1666 = vsub.s32 %v138, %v1665
        %v1667 = vrot.slane %v1525, %v1666
        %v1668 = vlaneseq
        %v1669 = vshrl.u32 %v1668, 7
        %v1670 = vsub.s32 %v138, %v1669
        %v1671 = vrot.slane %v1528, %v1670
        %v1672 = vlaneseq
        %v1673 = vshrl.u32 %v1672, 7
        %v1674 = vsub.s32 %v138, %v1673
        %v1675 = vrot.slane %v1531, %v1674
        %v1676 = vlaneseq
        %v1677 = vshrl.u32 %v1676, 7
        %v1678 = vsub.s32 %v138, %v1677
        %v1679 = vrot.slane %v1534, %v1678
        %v1680 = vlaneseq
        %v1681 = vshrl.u32 %v1680, 7
        %v1682 = vsub.s32 %v138, %v1681
        %v1683 = vrot.slane %v1537, %v1682
        %v1684 = vlaneseq
        %v1685 = vshrl.u32 %v1684, 7
        %v1686 = vsub.s32 %v138, %v1685
        %v1687 = vrot.slane %v1540, %v1686
        %v1688 = vlaneseq
        %v1689 = vshrl.u32 %v1688, 7
        %v1690 = vsub.s32 %v138, %v1689
        %v1691 = vrot.slane %v1543, %v1690
        %v1692 = vlaneseq
        %v1693 = vshrl.u32 %v1692, 7
        %v1694 = vsub.s32 %v138, %v1693
        %v1695 = vrot.slane %v1546, %v1694
        %v1696 = vlaneseq
        %v1697 = vshrl.u32 %v1696, 7
        %v1698 = vsub.s32 %v138, %v1697
        %v1699 = vrot.slane %v1549, %v1698
        %v1700 = vlaneseq
        %v1701 = vshrl.u32 %v1700, 7
        %v1702 = vsub.s32 %v138, %v1701
        %v1703 = vrot.slane %v1552, %v1702
        %v1704 = vlaneseq
        %v1705 = vshrl.u32 %v1704, 7
        %v1706 = vsub.s32 %v138, %v1705
        %v1707 = vrot.slane %v1555, %v1706
        %v1708 = vlaneseq
        %v1709 = vshrl.u32 %v1708, 7
        %v1710 = vsub.s32 %v138, %v1709
        %v1711 = vrot.slane %v1558, %v1710
        %v1712 = vlaneseq
        %v1713 = vshrl.u32 %v1712, 7
        %v1714 = vsub.s32 %v138, %v1713
        %v1715 = vrot.slane %v1561, %v1714
        %v1716 = vlaneseq
        %v1717 = vshrl.u32 %v1716, 7
        %v1718 = vsub.s32 %v138, %v1717
        %v1719 = vrot.slane %v1564, %v1718
        %v1720 = vlaneseq
        %v1721 = vshrl.u32 %v1720, 7
        %v1722 = vsub.s32 %v138, %v1721
        %v1723 = vrot.slane %v1567, %v1722
        %v1724 = vlaneseq
        %v1725 = vshrl.u32 %v1724, 7
        %v1726 = vsub.s32 %v138, %v1725
        %v1727 = vrot.slane %v1570, %v1726
        %v1728 = vlaneseq
        %v1729 = vshrl.u32 %v1728, 7
        %v1730 = vsub.s32 %v138, %v1729
        %v1731 = vrot.slane %v1573, %v1730
        %v1732 = vlaneseq
        %v1733 = vshrl.u32 %v1732, 7
        %v1734 = vsub.s32 %v138, %v1733
        %v1735 = vrot.slane %v1576, %v1734
        %v1736 = vlaneseq
        %v1737 = vshrl.u32 %v1736, 7
        %v1738 = vsub.s32 %v138, %v1737
        %v1739 = vrot.slane %v1579, %v1738
        %v1740 = vsel %vm596, %v1619, %v1615
        %v1741 = vsel %vm598, %v1623, %v1740
        %v1742 = vsel %vm600, %v1627, %v1741
        %v1743 = vsel %vm602, %v1631, %v1742
        %v1744 = vsel %vm604, %v1635, %v1743
        %v1745 = vsel %vm606, %v1639, %v1744
        %v1746 = vsel %vm608, %v1643, %v1745
        %v1747 = vsel %vm596, %v1651, %v1647
        %v1748 = vsel %vm598, %v1655, %v1747
        %v1749 = vsel %vm600, %v1659, %v1748
        %v1750 = vsel %vm602, %v1663, %v1749
        %v1751 = vsel %vm604, %v1667, %v1750
        %v1752 = vsel %vm606, %v1671, %v1751
        %v1753 = vsel %vm608, %v1675, %v1752
        %v1754 = vsel %vm596, %v1683, %v1679
        %v1755 = vsel %vm598, %v1687, %v1754
        %v1756 = vsel %vm600, %v1691, %v1755
        %v1757 = vsel %vm602, %v1695, %v1756
        %v1758 = vsel %vm604, %v1699, %v1757
        %v1759 = vsel %vm606, %v1703, %v1758
        %v1760 = vsel %vm608, %v1707, %v1759
        %v1761 = vsel %vm596, %v1715, %v1711
        %v1762 = vsel %vm598, %v1719, %v1761
        %v1763 = vsel %vm600, %v1723, %v1762
        %v1764 = vsel %vm602, %v1727, %v1763
        %v1765 = vsel %vm604, %v1731, %v1764
        %v1766 = vsel %vm606, %v1735, %v1765
        %v1767 = vsel %vm608, %v1739, %v1766
        %s1772 = scalar_lea.vmem %s134, 96 [#allocation5]
        %1773 = vst.msk [vmem:[%s1772] sm:$0xff] %vm635, %v1746
        %1774 = vst.msk [vmem:[%s1772 + $0x8] sm:$0xff] %vm635, %v1753
        %1775 = vst.msk [vmem:[%s1772 + $0x10] sm:$0xff] %vm635, %v1760
        %1776 = vst.msk [vmem:[%s1772 + $0x18] sm:$0xff] %vm635, %v1767
        %s1777 = sand.u32 %s52, 1
        %s1778 = scalar_lea.sflag [#allocation4], %s1777
        %s1779 = sand.u32 %s52, 1
        %s1780 = smul.addr %s1779, 128
        %s1781 = scalar_lea.vmem [#allocation5], %s1780
        // Predicated region
        $region29: #{space_to_depth.1} parent=23 // pred_check
          %p1782 = pneg %p62
        $region30: #{space_to_depth.1} parent=23 // pred_check_branch
          %1784 = sbr.rel (%p1782) target = $region32
        $region31: #{space_to_depth.1} parent=23 // pred_region
          #allocation7 [shape = 'u32[6]{0}', space=smem, size = 0x18, scoped, tag = 'DMA stride descriptor']
          %s1785 = smul.u32 4, %s18
          %s1787 = ssub.s32 2048, 2048
          %1788 = vsyncadd %s1778, %s1787
          %s1789 = smul.addr %s1785, 128
          %s1790 = scalar_lea.hbm %s1, %s1789
          %s1792 = sshll.u32 1, 14
          %s1793 = sxor.u32 4294967295, %s1792
          %s1796 = sshll.u32 7, 18
          %s1797 = sxor.u32 4294967295, %s1796
          %s1798 = sand.u32 0, %s1797
          %s1800 = sor.u32 %s1798, 0
          %s1801 = sshll.u32 %s1781, 4
          %s1802 = int_to_ptr.vmem [resolvable:$true] %s1801
          %1808 = sst [smem:[#allocation7]] 512
          %s1809 = scalar_lea.smem [#allocation7], 1
          %1810 = sst [smem:[%s1809]] 1024
          %s1811 = scalar_lea.smem [#allocation7], 2
          %1812 = sst [smem:[%s1811]] 4
          %s1813 = scalar_lea.smem [#allocation7], 3
          %1814 = sst [smem:[%s1813]] 128
          %s1815 = scalar_lea.smem [#allocation7], 4
          %1816 = sst [smem:[%s1815]] 128
          %s1817 = scalar_lea.smem [#allocation7], 5
          %1818 = sst [smem:[%s1817]] 8
          %1820 = dma.general %s1802, 2048, %s1790, %s1778, 131072, [#allocation7], %s1800, 0
        $region32: #{space_to_depth.1} parent=23 // pred_fallthru
          _
      $region24: #{space_to_depth.1} parent=5 // pred_fallthru
        _
      %p1821 = scmp.le.s32.totalorder 2, %s13
      // Predicated region
      $region33: #{space_to_depth.1} parent=5 // pred_check
        %p1822 = pneg %p1821
      $region34: #{space_to_depth.1} parent=5 // pred_check_branch
        %1824 = sbr.rel (%p1822) target = $region36
      $region35: #{space_to_depth.1} parent=5 // pred_region
        %s1825 = ssub.s32 %s13, 2
        // Predicated region
        $region37: #{space_to_depth.1} parent=35 // pred_check
          %p1826 = pneg %p68
        $region38: #{space_to_depth.1} parent=35 // pred_check_branch
          %1828 = sbr.rel (%p1826) target = $region40
        $region39: #{space_to_depth.1} parent=35 // pred_region
          %s1829 = sand.u32 %s53, 1
          %s1830 = scalar_lea.sflag [#allocation4], %s1829
          %s1831 = sand.u32 %s53, 1
          %s1832 = smul.addr %s1831, 128
          %s1833 = scalar_lea.vmem [#allocation5], %s1832
          %1834 = dma.done %s1830, 2048
        $region40: #{space_to_depth.1} parent=35 // pred_fallthru
          _
      $region36: #{space_to_depth.1} parent=5 // pred_fallthru
        _
    $region6: #{space_to_depth.1} parent=1 // loop_footer
      %s17 = sadd.s32 1, %s13
    $region7: #{space_to_depth.1} parent=1 // loop_footer_branch
      %12 = sbr.rel target = $region3
    $region8: #{space_to_depth.1} parent=1 // loop_exit
      _
    %1835 = vsyncpa [#allocation3], 1
    %s1836 = scalar_lea.sflag [#allocation3], 1
    %1837 = vsyncpa %s1836, 1
    %1838 = vsyncpa [#allocation4], 1
    %s1839 = scalar_lea.sflag [#allocation4], 1
    %1840 = vsyncpa %s1839, 1

</llo_original>
